<compile_context>
chip_gen: v7x
topology: tpu7x:2x2x1
jax: 0.10.0
libtpu: 0.0.40
codegen_flags: <defaults>
</compile_context>

<pallas_src>
import math
from functools import partial

import jax
import jax.numpy as jnp
from jax.experimental import pallas as pl
from jax.experimental.pallas import tpu as pltpu


_WEIGHT_NAMES = ["wqkv", "bqkv", "wo", "bo", "g1", "be1",
                 "w1", "b1", "w2", "b2", "g2", "be2"]


def _layer_norm(x, gamma, beta, eps=1e-5):
    # x: (N, D); gamma/beta: (1, D). Matches torch.nn.LayerNorm(embed_dim).
    mean = jnp.mean(x, axis=-1, keepdims=True)
    var = jnp.mean(jnp.square(x - mean), axis=-1, keepdims=True)
    return (x - mean) * jax.lax.rsqrt(var + eps) * gamma + beta


# -----------------------------------------------------------------------------
# Pallas kernel: grid = (row_blocks, layers).  One encoder layer per inner grid
# step; activations for the current row block are carried in o_ref (its block
# index is constant along the layer axis).
# -----------------------------------------------------------------------------
def encoder_stack_kernel(
    x_ref,                      # (R, D) f32  embedded inputs (read at layer 0)
    wqkv_ref, bqkv_ref,         # (1, D, 3D) bf16, (1, 1, 3D) f32
    wo_ref, bo_ref,             # (1, D, D)  bf16, (1, 1, D)  f32
    g1_ref, be1_ref,            # (1, 1, D) f32 LayerNorm1
    w1_ref, b1_ref,             # (1, D, Dff) bf16, (1, 1, Dff) f32
    w2_ref, b2_ref,             # (1, Dff, D) bf16, (1, 1, D)  f32
    g2_ref, be2_ref,            # (1, 1, D) f32 LayerNorm2
    o_ref,                      # (R, D) f32  output / resident layer carry
    *,
    num_heads: int,
    seq: int,
    batch_per_block: int,
):
    layer = pl.program_id(1)

    # Initialize the resident carry with the embedded inputs at the first layer.
    @pl.when(layer == 0)
    def _():
        o_ref[...] = x_ref[...]

    x = o_ref[...]                              # (R, D) f32, previous layer out
    R, D = x.shape
    H = num_heads
    Dh = D // H
    S = seq
    Bb = batch_per_block                        # batch elements in this row block

    # ---- Fused Q/K/V projection (single MXU matmul, bf16 operands, f32 acc) --
    xb = x.astype(jnp.bfloat16)
    qkv = jnp.dot(xb, wqkv_ref[0], preferred_element_type=jnp.float32) + bqkv_ref[0]
    q = qkv[:, :D]
    k = qkv[:, D:2 * D]
    v = qkv[:, 2 * D:]

    # ---- Per-batch, per-head attention (no block-diagonal mask, no (1,0,2)
    #      transposes: heads are static lane slices, batch is a contiguous
    #      row reshape).
    scale = 1.0 / math.sqrt(Dh)
    ctx_heads = []
    for h in range(H):
        sl = slice(h * Dh, (h + 1) * Dh)
        qh = q[:, sl].reshape(Bb, S, Dh)
        kh = k[:, sl].reshape(Bb, S, Dh)
        vh = v[:, sl].reshape(Bb, S, Dh)
        s = jnp.einsum("bqd,bkd->bqk", qh, kh,
                       preferred_element_type=jnp.float32) * scale     # (Bb,S,S)
        s = s - jnp.max(s, axis=-1, keepdims=True)
        p = jnp.exp(s)
        p = p * pl.reciprocal(jnp.sum(p, axis=-1, keepdims=True), approx=True)
        ch = jnp.einsum("bqk,bkd->bqd", p, vh,
                        preferred_element_type=jnp.float32)            # (Bb,S,Dh)
        ctx_heads.append(ch.reshape(R, Dh))
    ctx = jnp.concatenate(ctx_heads, axis=-1)                          # (R, D)

    attn = jnp.dot(ctx.astype(jnp.bfloat16), wo_ref[0],
                   preferred_element_type=jnp.float32) + bo_ref[0]

    # ---- Add & LayerNorm 1 ---------------------------------------------------
    h1 = _layer_norm(attn + x, g1_ref[0], be1_ref[0])

    # ---- Position-wise FFN: Linear -> ReLU -> Linear (-> Dropout=identity) ---
    ff = jnp.dot(h1.astype(jnp.bfloat16), w1_ref[0],
                 preferred_element_type=jnp.float32) + b1_ref[0]
    ff = jnp.maximum(ff, 0.0)
    ff = jnp.dot(ff.astype(jnp.bfloat16), w2_ref[0],
                 preferred_element_type=jnp.float32) + b2_ref[0]

    # ---- Add & LayerNorm 2 ---------------------------------------------------
    out = _layer_norm(ff + h1, g2_ref[0], be2_ref[0])

    o_ref[...] = out.astype(o_ref.dtype)


# -----------------------------------------------------------------------------
# VMEM budget: double-buffered per-layer weights + resident carry + scratch,
# clamped below the physical VMEM of whatever chip we are on.
# -----------------------------------------------------------------------------
def _vmem_limit_bytes(stacked, rows, D, S, batch_per_block):
    per_layer_w = sum(
        int(math.prod(stacked[n].shape[1:])) * stacked[n].dtype.itemsize
        for n in _WEIGHT_NAMES)
    act = rows * D * 4
    scratch = (batch_per_block * S * S * 4 * 2       # scores + probs (per head)
               + rows * 3 * D * 4                    # fused QKV
               + rows * 4 * D * 4)                   # FFN intermediate
    need = 2 * per_layer_w + 3 * act + scratch
    need = int(need * 1.5) + (8 << 20)               # headroom for spills/copies
    try:
        cap = pltpu.get_tpu_info().vmem_capacity_bytes
    except Exception:
        cap = 64 << 20                               # conservative (v7x physical)
    return int(min(max(need, 32 << 20), cap - (cap >> 3)))


# -----------------------------------------------------------------------------
# Wrapper: one pallas_call for all layers; rows split along batch boundaries
# on a leading "parallel" axis (uses both TensorCores on v7x).
# -----------------------------------------------------------------------------
def encoder_layers_fused(x, stacked, num_heads):
    """x: (B, S, D) f32 embedded activations; stacked: per-layer weight stacks."""
    B, S, D = x.shape
    L = stacked["wqkv"].shape[0]
    BS = B * S
    x2 = x.reshape(BS, D).astype(jnp.float32)

    # Row-block split along batch boundaries (2 blocks when layout permits).
    if B % 2 == 0 and ((B // 2) * S) % 8 == 0:
        G = 2
    else:
        G = 1
    batch_per_block = B // G
    rows = batch_per_block * S

    def weight_spec(shape):
        nd = len(shape)
        return pl.BlockSpec(
            (1,) + tuple(shape[1:]),
            lambda g, l, _nd=nd: (l,) + (0,) * (_nd - 1),
        )

    in_specs = [pl.BlockSpec((rows, D), lambda g, l: (g, 0))]
    in_specs += [weight_spec(stacked[n].shape) for n in _WEIGHT_NAMES]
    args = [x2] + [stacked[n] for n in _WEIGHT_NAMES]

    out = pl.pallas_call(
        partial(encoder_stack_kernel, num_heads=num_heads, seq=S,
                batch_per_block=batch_per_block),
        out_shape=jax.ShapeDtypeStruct((BS, D), jnp.float32),
        grid_spec=pl.GridSpec(
            grid=(G, L),
            in_specs=in_specs,
            out_specs=pl.BlockSpec((rows, D), lambda g, l: (g, 0)),
        ),
        compiler_params=pltpu.CompilerParams(
            dimension_semantics=("parallel", "arbitrary"),
            vmem_limit_bytes=_vmem_limit_bytes(stacked, rows, D, S,
                                               batch_per_block),
        ),
    )(*args)
    return out.reshape(B, S, D)


# -----------------------------------------------------------------------------
# Full Encoder forward (embedding glue in plain JAX, whole stack in one kernel).
# -----------------------------------------------------------------------------
def encoder_forward(token_ids, params, num_heads):
    """token_ids: (B, S) int32."""
    B, S = token_ids.shape
    D = params["embed"].shape[1]
    pos = jnp.arange(S, dtype=jnp.int32)
    x = params["embed"][token_ids] * math.sqrt(D) + params["pos_embed"][pos][None, :, :]
    return encoder_layers_fused(x.astype(jnp.float32), params["layers"], num_heads)


# -----------------------------------------------------------------------------
# Deterministic parameter initialization (synthetic, no checkpoint loading).
# Weights stored (in, out): y = x @ W + b  (== PyTorch y = x @ W_pt.T + b).
# -----------------------------------------------------------------------------
def init_params(key, num_layers, num_heads, input_size, embed_dim, max_seq_len):
    D, Dff = embed_dim, 4 * embed_dim
    L = num_layers
    keys = jax.random.split(key, 2 + L)

    params = {
        "embed": 0.02 * jax.random.normal(keys[0], (input_size, D), jnp.float32),
        "pos_embed": 0.02 * jax.random.normal(keys[1], (max_seq_len, D), jnp.float32),
    }

    wqkv_l, wo_l, w1_l, w2_l = [], [], [], []
    for li in range(L):
        lk = jax.random.split(keys[2 + li], 6)
        s = 1.0 / math.sqrt(D)
        wq = s * jax.random.normal(lk[0], (D, D), jnp.float32)
        wk = s * jax.random.normal(lk[1], (D, D), jnp.float32)
        wv = s * jax.random.normal(lk[2], (D, D), jnp.float32)
        wqkv_l.append(jnp.concatenate([wq, wk, wv], axis=1))          # (D, 3D)
        wo_l.append(s * jax.random.normal(lk[3], (D, D), jnp.float32))
        w1_l.append(s * jax.random.normal(lk[4], (D, Dff), jnp.float32))
        w2_l.append((1.0 / math.sqrt(Dff)) * jax.random.normal(lk[5], (Dff, D), jnp.float32))

    params["layers"] = {
        # Matmul weights in bf16 (f32 accumulation inside the kernel).
        "wqkv": jnp.stack(wqkv_l).astype(jnp.bfloat16),               # (L, D, 3D)
        "bqkv": jnp.zeros((L, 1, 3 * D), jnp.float32),
        "wo":   jnp.stack(wo_l).astype(jnp.bfloat16),                 # (L, D, D)
        "bo":   jnp.zeros((L, 1, D), jnp.float32),
        "g1":   jnp.ones((L, 1, D), jnp.float32),
        "be1":  jnp.zeros((L, 1, D), jnp.float32),
        "w1":   jnp.stack(w1_l).astype(jnp.bfloat16),                 # (L, D, Dff)
        "b1":   jnp.zeros((L, 1, Dff), jnp.float32),
        "w2":   jnp.stack(w2_l).astype(jnp.bfloat16),                 # (L, Dff, D)
        "b2":   jnp.zeros((L, 1, D), jnp.float32),
        "g2":   jnp.ones((L, 1, D), jnp.float32),
        "be2":  jnp.zeros((L, 1, D), jnp.float32),
    }
    return params


if __name__ == "__main__":
    # Small config consistent with Encoder(num_layers, MHA_num_heads,
    #                                      input_size, embed_dim, max_seq_len).
    # embed_dim is kept lane-aligned (128) so stores are unmasked and the MXU
    # contraction dims are 128-multiples.
    num_layers = 2
    num_heads = 4
    input_size = 16      # vocab size
    embed_dim = 128
    max_seq_len = 8
    batch_size = 2
    seq_len = 8

    key = jax.random.PRNGKey(0)
    pkey, xkey = jax.random.split(key)
    params = init_params(pkey, num_layers, num_heads, input_size, embed_dim, max_seq_len)

    token_ids = jax.random.randint(xkey, (batch_size, seq_len), 0, input_size, jnp.int32)

    out = encoder_forward(token_ids, params, num_heads)
    out = jax.block_until_ready(out)

    assert out.shape == (batch_size, seq_len, embed_dim)
    assert jnp.all(jnp.isfinite(out))
    print("KERNEL_OK")
</pallas_src>

<mosaic_0001>
module attributes {stable_mosaic.version = 11 : i64} {
  func.func @encoder_stack_kernel(%arg0: i32, %arg1: i32, %arg2: memref<8x128xf32, #tpu.memory_space<vmem>>, %arg3: memref<1x128x384xbf16, #tpu.memory_space<vmem>>, %arg4: memref<1x1x384xf32, #tpu.memory_space<vmem>>, %arg5: memref<1x128x128xbf16, #tpu.memory_space<vmem>>, %arg6: memref<1x1x128xf32, #tpu.memory_space<vmem>>, %arg7: memref<1x1x128xf32, #tpu.memory_space<vmem>>, %arg8: memref<1x1x128xf32, #tpu.memory_space<vmem>>, %arg9: memref<1x128x512xbf16, #tpu.memory_space<vmem>>, %arg10: memref<1x1x512xf32, #tpu.memory_space<vmem>>, %arg11: memref<1x512x128xbf16, #tpu.memory_space<vmem>>, %arg12: memref<1x1x128xf32, #tpu.memory_space<vmem>>, %arg13: memref<1x1x128xf32, #tpu.memory_space<vmem>>, %arg14: memref<1x1x128xf32, #tpu.memory_space<vmem>>, %arg15: memref<8x128xf32, #tpu.memory_space<vmem>>) attributes {dimension_semantics = [#tpu.dimension_semantics<parallel>, #tpu.dimension_semantics<arbitrary>], iteration_bounds = array<i64: 2, 2>, scalar_prefetch = 0 : i64, scratch_operands = 0 : i64, tpu.core_type = #tpu.core_type<tc>, window_params = [{transform_indices = @transform_0, window_bounds = array<i64: 8, 128>}, {transform_indices = @transform_1, window_bounds = array<i64: 1, 128, 384>}, {transform_indices = @transform_2, window_bounds = array<i64: 1, 1, 384>}, {transform_indices = @transform_3, window_bounds = array<i64: 1, 128, 128>}, {transform_indices = @transform_4, window_bounds = array<i64: 1, 1, 128>}, {transform_indices = @transform_5, window_bounds = array<i64: 1, 1, 128>}, {transform_indices = @transform_6, window_bounds = array<i64: 1, 1, 128>}, {transform_indices = @transform_7, window_bounds = array<i64: 1, 128, 512>}, {transform_indices = @transform_8, window_bounds = array<i64: 1, 1, 512>}, {transform_indices = @transform_9, window_bounds = array<i64: 1, 512, 128>}, {transform_indices = @transform_10, window_bounds = array<i64: 1, 1, 128>}, {transform_indices = @transform_11, window_bounds = array<i64: 1, 1, 128>}, {transform_indices = @transform_12, window_bounds = array<i64: 1, 1, 128>}, {transform_indices = @transform_13, window_bounds = array<i64: 8, 128>}]} {
    %c0_i32 = arith.constant 0 : i32
    %0 = arith.cmpi eq, %arg1, %c0_i32 : i32
    %1 = arith.extui %0 : i1 to i32
    %c0_i32_0 = arith.constant 0 : i32
    %2 = arith.cmpi ne, %1, %c0_i32_0 : i32
    scf.if %2 {
      %c0_74 = arith.constant 0 : index
      %c0_75 = arith.constant 0 : index
      %181 = vector.load %arg2[%c0_74, %c0_75] : memref<8x128xf32, #tpu.memory_space<vmem>>, vector<8x128xf32>
      %c0_76 = arith.constant 0 : index
      %c0_77 = arith.constant 0 : index
      %182 = vector.load %arg15[%c0_76, %c0_77] : memref<8x128xf32, #tpu.memory_space<vmem>>, vector<8x128xf32>
      tpu.vector_store %arg15[%c0_76, %c0_77], %181 {strides = array<i32>} : memref<8x128xf32, #tpu.memory_space<vmem>>, vector<8x128xf32>,
    } else {
    }
    %c0 = arith.constant 0 : index
    %c0_1 = arith.constant 0 : index
    %3 = vector.load %arg15[%c0, %c0_1] : memref<8x128xf32, #tpu.memory_space<vmem>>, vector<8x128xf32>
    %4 = arith.truncf %3 : vector<8x128xf32> to vector<8x128xbf16>
    %c0_2 = arith.constant 0 : index
    %c0_3 = arith.constant 0 : index
    %c0_4 = arith.constant 0 : index
    %5 = vector.load %arg3[%c0_2, %c0_3, %c0_4] : memref<1x128x384xbf16, #tpu.memory_space<vmem>>, vector<1x128x384xbf16>
    %6 = vector.shape_cast %5 : vector<1x128x384xbf16> to vector<128x384xbf16>
    %cst = arith.constant dense<0.000000e+00> : vector<8x384xf32>
    %7 = tpu.matmul %4, %6, %cst {dimension_numbers = #tpu.dot_dimension_numbers<[1], [0], [0], [1], [0, 0, 1, 1], [], []>} : vector<8x128xbf16>, vector<128x384xbf16>, vector<8x384xf32> -> vector<8x384xf32>
    %c0_5 = arith.constant 0 : index
    %c0_6 = arith.constant 0 : index
    %c0_7 = arith.constant 0 : index
    %8 = vector.load %arg4[%c0_5, %c0_6, %c0_7] : memref<1x1x384xf32, #tpu.memory_space<vmem>>, vector<1x1x384xf32>
    %9 = vector.shape_cast %8 : vector<1x1x384xf32> to vector<1x384xf32>
    %10 = vector.broadcast %9 : vector<1x384xf32> to vector<8x384xf32>
    %11 = arith.addf %7, %10 : vector<8x384xf32>
    %12 = vector.extract_strided_slice %11 {offsets = [0, 0], sizes = [8, 128], strides = [1, 1]} : vector<8x384xf32> to vector<8x128xf32>
    %13 = vector.extract_strided_slice %11 {offsets = [0, 128], sizes = [8, 128], strides = [1, 1]} : vector<8x384xf32> to vector<8x128xf32>
    %14 = vector.extract_strided_slice %11 {offsets = [0, 256], sizes = [8, 128], strides = [1, 1]} : vector<8x384xf32> to vector<8x128xf32>
    %15 = vector.extract_strided_slice %12 {offsets = [0, 0], sizes = [8, 32], strides = [1, 1]} : vector<8x128xf32> to vector<8x32xf32>
    %16 = vector.shape_cast %15 : vector<8x32xf32> to vector<1x8x32xf32>
    %17 = vector.extract_strided_slice %13 {offsets = [0, 0], sizes = [8, 32], strides = [1, 1]} : vector<8x128xf32> to vector<8x32xf32>
    %18 = vector.shape_cast %17 : vector<8x32xf32> to vector<1x8x32xf32>
    %19 = vector.extract_strided_slice %14 {offsets = [0, 0], sizes = [8, 32], strides = [1, 1]} : vector<8x128xf32> to vector<8x32xf32>
    %20 = vector.shape_cast %19 : vector<8x32xf32> to vector<1x8x32xf32>
    "tpu.trace_start"() <{level = 10 : i32, message = "bqd,bkd->bqk"}> : () -> ()
    %cst_8 = arith.constant dense<0.000000e+00> : vector<1x8x8xf32>
    %21 = tpu.matmul %16, %18, %cst_8 {dimension_numbers = #tpu.dot_dimension_numbers<[2], [2], [1], [1], [0, 0, 0, 1, 1, 1], [0], [0]>} : vector<1x8x32xf32>, vector<1x8x32xf32>, vector<1x8x8xf32> -> vector<1x8x8xf32>
    "tpu.trace_stop"() : () -> ()
    %cst_9 = arith.constant 0.176776692 : f32
    %22 = vector.broadcast %cst_9 : f32 to vector<1x8x8xf32>
    %23 = arith.mulf %21, %22 : vector<1x8x8xf32>
    %cst_10 = arith.constant dense<0xFF800000> : vector<1x8xf32>
    %24 = vector.multi_reduction <maximumf>, %23, %cst_10 [2] : vector<1x8x8xf32> to vector<1x8xf32>
    %25 = vector.shape_cast %24 : vector<1x8xf32> to vector<1x8x1xf32>
    %26 = vector.broadcast %25 : vector<1x8x1xf32> to vector<1x8x8xf32>
    %27 = arith.subf %23, %26 : vector<1x8x8xf32>
    %28 = math.exp %27 : vector<1x8x8xf32>
    %cst_11 = arith.constant dense<0.000000e+00> : vector<1x8xf32>
    %29 = vector.multi_reduction <add>, %28, %cst_11 [2] : vector<1x8x8xf32> to vector<1x8xf32>
    %30 = vector.shape_cast %29 : vector<1x8xf32> to vector<1x8x1xf32>
    %31 = tpu.reciprocal %30 {approx = true} : vector<1x8x1xf32> -> vector<1x8x1xf32>
    %32 = vector.broadcast %31 : vector<1x8x1xf32> to vector<1x8x8xf32>
    %33 = arith.mulf %28, %32 : vector<1x8x8xf32>
    "tpu.trace_start"() <{level = 10 : i32, message = "bqk,bkd->bqd"}> : () -> ()
    %cst_12 = arith.constant dense<0.000000e+00> : vector<1x8x32xf32>
    %34 = tpu.matmul %33, %20, %cst_12 {dimension_numbers = #tpu.dot_dimension_numbers<[2], [1], [1], [2], [0, 0, 0, 1, 1, 2], [0], [0]>} : vector<1x8x8xf32>, vector<1x8x32xf32>, vector<1x8x32xf32> -> vector<1x8x32xf32>
    "tpu.trace_stop"() : () -> ()
    %35 = vector.shape_cast %34 : vector<1x8x32xf32> to vector<8x32xf32>
    %36 = vector.extract_strided_slice %12 {offsets = [0, 32], sizes = [8, 32], strides = [1, 1]} : vector<8x128xf32> to vector<8x32xf32>
    %37 = vector.shape_cast %36 : vector<8x32xf32> to vector<1x8x32xf32>
    %38 = vector.extract_strided_slice %13 {offsets = [0, 32], sizes = [8, 32], strides = [1, 1]} : vector<8x128xf32> to vector<8x32xf32>
    %39 = vector.shape_cast %38 : vector<8x32xf32> to vector<1x8x32xf32>
    %40 = vector.extract_strided_slice %14 {offsets = [0, 32], sizes = [8, 32], strides = [1, 1]} : vector<8x128xf32> to vector<8x32xf32>
    %41 = vector.shape_cast %40 : vector<8x32xf32> to vector<1x8x32xf32>
    "tpu.trace_start"() <{level = 10 : i32, message = "bqd,bkd->bqk"}> : () -> ()
    %cst_13 = arith.constant dense<0.000000e+00> : vector<1x8x8xf32>
    %42 = tpu.matmul %37, %39, %cst_13 {dimension_numbers = #tpu.dot_dimension_numbers<[2], [2], [1], [1], [0, 0, 0, 1, 1, 1], [0], [0]>} : vector<1x8x32xf32>, vector<1x8x32xf32>, vector<1x8x8xf32> -> vector<1x8x8xf32>
    "tpu.trace_stop"() : () -> ()
    %cst_14 = arith.constant 0.176776692 : f32
    %43 = vector.broadcast %cst_14 : f32 to vector<1x8x8xf32>
    %44 = arith.mulf %42, %43 : vector<1x8x8xf32>
    %cst_15 = arith.constant dense<0xFF800000> : vector<1x8xf32>
    %45 = vector.multi_reduction <maximumf>, %44, %cst_15 [2] : vector<1x8x8xf32> to vector<1x8xf32>
    %46 = vector.shape_cast %45 : vector<1x8xf32> to vector<1x8x1xf32>
    %47 = vector.broadcast %46 : vector<1x8x1xf32> to vector<1x8x8xf32>
    %48 = arith.subf %44, %47 : vector<1x8x8xf32>
    %49 = math.exp %48 : vector<1x8x8xf32>
    %cst_16 = arith.constant dense<0.000000e+00> : vector<1x8xf32>
    %50 = vector.multi_reduction <add>, %49, %cst_16 [2] : vector<1x8x8xf32> to vector<1x8xf32>
    %51 = vector.shape_cast %50 : vector<1x8xf32> to vector<1x8x1xf32>
    %52 = tpu.reciprocal %51 {approx = true} : vector<1x8x1xf32> -> vector<1x8x1xf32>
    %53 = vector.broadcast %52 : vector<1x8x1xf32> to vector<1x8x8xf32>
    %54 = arith.mulf %49, %53 : vector<1x8x8xf32>
    "tpu.trace_start"() <{level = 10 : i32, message = "bqk,bkd->bqd"}> : () -> ()
    %cst_17 = arith.constant dense<0.000000e+00> : vector<1x8x32xf32>
    %55 = tpu.matmul %54, %41, %cst_17 {dimension_numbers = #tpu.dot_dimension_numbers<[2], [1], [1], [2], [0, 0, 0, 1, 1, 2], [0], [0]>} : vector<1x8x8xf32>, vector<1x8x32xf32>, vector<1x8x32xf32> -> vector<1x8x32xf32>
    "tpu.trace_stop"() : () -> ()
    %56 = vector.shape_cast %55 : vector<1x8x32xf32> to vector<8x32xf32>
    %57 = vector.extract_strided_slice %12 {offsets = [0, 64], sizes = [8, 32], strides = [1, 1]} : vector<8x128xf32> to vector<8x32xf32>
    %58 = vector.shape_cast %57 : vector<8x32xf32> to vector<1x8x32xf32>
    %59 = vector.extract_strided_slice %13 {offsets = [0, 64], sizes = [8, 32], strides = [1, 1]} : vector<8x128xf32> to vector<8x32xf32>
    %60 = vector.shape_cast %59 : vector<8x32xf32> to vector<1x8x32xf32>
    %61 = vector.extract_strided_slice %14 {offsets = [0, 64], sizes = [8, 32], strides = [1, 1]} : vector<8x128xf32> to vector<8x32xf32>
    %62 = vector.shape_cast %61 : vector<8x32xf32> to vector<1x8x32xf32>
    "tpu.trace_start"() <{level = 10 : i32, message = "bqd,bkd->bqk"}> : () -> ()
    %cst_18 = arith.constant dense<0.000000e+00> : vector<1x8x8xf32>
    %63 = tpu.matmul %58, %60, %cst_18 {dimension_numbers = #tpu.dot_dimension_numbers<[2], [2], [1], [1], [0, 0, 0, 1, 1, 1], [0], [0]>} : vector<1x8x32xf32>, vector<1x8x32xf32>, vector<1x8x8xf32> -> vector<1x8x8xf32>
    "tpu.trace_stop"() : () -> ()
    %cst_19 = arith.constant 0.176776692 : f32
    %64 = vector.broadcast %cst_19 : f32 to vector<1x8x8xf32>
    %65 = arith.mulf %63, %64 : vector<1x8x8xf32>
    %cst_20 = arith.constant dense<0xFF800000> : vector<1x8xf32>
    %66 = vector.multi_reduction <maximumf>, %65, %cst_20 [2] : vector<1x8x8xf32> to vector<1x8xf32>
    %67 = vector.shape_cast %66 : vector<1x8xf32> to vector<1x8x1xf32>
    %68 = vector.broadcast %67 : vector<1x8x1xf32> to vector<1x8x8xf32>
    %69 = arith.subf %65, %68 : vector<1x8x8xf32>
    %70 = math.exp %69 : vector<1x8x8xf32>
    %cst_21 = arith.constant dense<0.000000e+00> : vector<1x8xf32>
    %71 = vector.multi_reduction <add>, %70, %cst_21 [2] : vector<1x8x8xf32> to vector<1x8xf32>
    %72 = vector.shape_cast %71 : vector<1x8xf32> to vector<1x8x1xf32>
    %73 = tpu.reciprocal %72 {approx = true} : vector<1x8x1xf32> -> vector<1x8x1xf32>
    %74 = vector.broadcast %73 : vector<1x8x1xf32> to vector<1x8x8xf32>
    %75 = arith.mulf %70, %74 : vector<1x8x8xf32>
    "tpu.trace_start"() <{level = 10 : i32, message = "bqk,bkd->bqd"}> : () -> ()
    %cst_22 = arith.constant dense<0.000000e+00> : vector<1x8x32xf32>
    %76 = tpu.matmul %75, %62, %cst_22 {dimension_numbers = #tpu.dot_dimension_numbers<[2], [1], [1], [2], [0, 0, 0, 1, 1, 2], [0], [0]>} : vector<1x8x8xf32>, vector<1x8x32xf32>, vector<1x8x32xf32> -> vector<1x8x32xf32>
    "tpu.trace_stop"() : () -> ()
    %77 = vector.shape_cast %76 : vector<1x8x32xf32> to vector<8x32xf32>
    %78 = vector.extract_strided_slice %12 {offsets = [0, 96], sizes = [8, 32], strides = [1, 1]} : vector<8x128xf32> to vector<8x32xf32>
    %79 = vector.shape_cast %78 : vector<8x32xf32> to vector<1x8x32xf32>
    %80 = vector.extract_strided_slice %13 {offsets = [0, 96], sizes = [8, 32], strides = [1, 1]} : vector<8x128xf32> to vector<8x32xf32>
    %81 = vector.shape_cast %80 : vector<8x32xf32> to vector<1x8x32xf32>
    %82 = vector.extract_strided_slice %14 {offsets = [0, 96], sizes = [8, 32], strides = [1, 1]} : vector<8x128xf32> to vector<8x32xf32>
    %83 = vector.shape_cast %82 : vector<8x32xf32> to vector<1x8x32xf32>
    "tpu.trace_start"() <{level = 10 : i32, message = "bqd,bkd->bqk"}> : () -> ()
    %cst_23 = arith.constant dense<0.000000e+00> : vector<1x8x8xf32>
    %84 = tpu.matmul %79, %81, %cst_23 {dimension_numbers = #tpu.dot_dimension_numbers<[2], [2], [1], [1], [0, 0, 0, 1, 1, 1], [0], [0]>} : vector<1x8x32xf32>, vector<1x8x32xf32>, vector<1x8x8xf32> -> vector<1x8x8xf32>
    "tpu.trace_stop"() : () -> ()
    %cst_24 = arith.constant 0.176776692 : f32
    %85 = vector.broadcast %cst_24 : f32 to vector<1x8x8xf32>
    %86 = arith.mulf %84, %85 : vector<1x8x8xf32>
    %cst_25 = arith.constant dense<0xFF800000> : vector<1x8xf32>
    %87 = vector.multi_reduction <maximumf>, %86, %cst_25 [2] : vector<1x8x8xf32> to vector<1x8xf32>
    %88 = vector.shape_cast %87 : vector<1x8xf32> to vector<1x8x1xf32>
    %89 = vector.broadcast %88 : vector<1x8x1xf32> to vector<1x8x8xf32>
    %90 = arith.subf %86, %89 : vector<1x8x8xf32>
    %91 = math.exp %90 : vector<1x8x8xf32>
    %cst_26 = arith.constant dense<0.000000e+00> : vector<1x8xf32>
    %92 = vector.multi_reduction <add>, %91, %cst_26 [2] : vector<1x8x8xf32> to vector<1x8xf32>
    %93 = vector.shape_cast %92 : vector<1x8xf32> to vector<1x8x1xf32>
    %94 = tpu.reciprocal %93 {approx = true} : vector<1x8x1xf32> -> vector<1x8x1xf32>
    %95 = vector.broadcast %94 : vector<1x8x1xf32> to vector<1x8x8xf32>
    %96 = arith.mulf %91, %95 : vector<1x8x8xf32>
    "tpu.trace_start"() <{level = 10 : i32, message = "bqk,bkd->bqd"}> : () -> ()
    %cst_27 = arith.constant dense<0.000000e+00> : vector<1x8x32xf32>
    %97 = tpu.matmul %96, %83, %cst_27 {dimension_numbers = #tpu.dot_dimension_numbers<[2], [1], [1], [2], [0, 0, 0, 1, 1, 2], [0], [0]>} : vector<1x8x8xf32>, vector<1x8x32xf32>, vector<1x8x32xf32> -> vector<1x8x32xf32>
    "tpu.trace_stop"() : () -> ()
    %98 = vector.shape_cast %97 : vector<1x8x32xf32> to vector<8x32xf32>
    %99 = tpu.concatenate %35, %56, %77, %98 in 1 : vector<8x32xf32>, vector<8x32xf32>, vector<8x32xf32>, vector<8x32xf32> -> vector<8x128xf32>
    %100 = arith.truncf %99 : vector<8x128xf32> to vector<8x128xbf16>
    %c0_28 = arith.constant 0 : index
    %c0_29 = arith.constant 0 : index
    %c0_30 = arith.constant 0 : index
    %101 = vector.load %arg5[%c0_28, %c0_29, %c0_30] : memref<1x128x128xbf16, #tpu.memory_space<vmem>>, vector<1x128x128xbf16>
    %102 = vector.shape_cast %101 : vector<1x128x128xbf16> to vector<128x128xbf16>
    %cst_31 = arith.constant dense<0.000000e+00> : vector<8x128xf32>
    %103 = tpu.matmul %100, %102, %cst_31 {dimension_numbers = #tpu.dot_dimension_numbers<[1], [0], [0], [1], [0, 0, 1, 1], [], []>} : vector<8x128xbf16>, vector<128x128xbf16>, vector<8x128xf32> -> vector<8x128xf32>
    %c0_32 = arith.constant 0 : index
    %c0_33 = arith.constant 0 : index
    %c0_34 = arith.constant 0 : index
    %104 = vector.load %arg6[%c0_32, %c0_33, %c0_34] : memref<1x1x128xf32, #tpu.memory_space<vmem>>, vector<1x1x128xf32>
    %105 = vector.shape_cast %104 : vector<1x1x128xf32> to vector<1x128xf32>
    %106 = vector.broadcast %105 : vector<1x128xf32> to vector<8x128xf32>
    %107 = arith.addf %103, %106 : vector<8x128xf32>
    %108 = arith.addf %107, %3 : vector<8x128xf32>
    %c0_35 = arith.constant 0 : index
    %c0_36 = arith.constant 0 : index
    %c0_37 = arith.constant 0 : index
    %109 = vector.load %arg7[%c0_35, %c0_36, %c0_37] : memref<1x1x128xf32, #tpu.memory_space<vmem>>, vector<1x1x128xf32>
    %110 = vector.shape_cast %109 : vector<1x1x128xf32> to vector<1x128xf32>
    %c0_38 = arith.constant 0 : index
    %c0_39 = arith.constant 0 : index
    %c0_40 = arith.constant 0 : index
    %111 = vector.load %arg8[%c0_38, %c0_39, %c0_40] : memref<1x1x128xf32, #tpu.memory_space<vmem>>, vector<1x1x128xf32>
    %112 = vector.shape_cast %111 : vector<1x1x128xf32> to vector<1x128xf32>
    %cst_41 = arith.constant dense<0.000000e+00> : vector<8xf32>
    %113 = vector.multi_reduction <add>, %108, %cst_41 [1] : vector<8x128xf32> to vector<8xf32>
    %114 = vector.shape_cast %113 : vector<8xf32> to vector<8x1xf32>
    %cst_42 = arith.constant 1.280000e+02 : f32
    %115 = vector.broadcast %cst_42 : f32 to vector<8x1xf32>
    %116 = arith.divf %114, %115 : vector<8x1xf32>
    %117 = vector.broadcast %116 : vector<8x1xf32> to vector<8x128xf32>
    %118 = arith.subf %108, %117 : vector<8x128xf32>
    %119 = arith.mulf %118, %118 : vector<8x128xf32>
    %cst_43 = arith.constant dense<0.000000e+00> : vector<8xf32>
    %120 = vector.multi_reduction <add>, %119, %cst_43 [1] : vector<8x128xf32> to vector<8xf32>
    %121 = vector.shape_cast %120 : vector<8xf32> to vector<8x1xf32>
    %cst_44 = arith.constant 1.280000e+02 : f32
    %122 = vector.broadcast %cst_44 : f32 to vector<8x1xf32>
    %123 = arith.divf %121, %122 : vector<8x1xf32>
    %124 = vector.broadcast %116 : vector<8x1xf32> to vector<8x128xf32>
    %125 = arith.subf %108, %124 : vector<8x128xf32>
    %cst_45 = arith.constant 9.99999974E-6 : f32
    %126 = vector.broadcast %cst_45 : f32 to vector<8x1xf32>
    %127 = arith.addf %123, %126 : vector<8x1xf32>
    %128 = math.rsqrt %127 : vector<8x1xf32>
    %129 = vector.broadcast %128 : vector<8x1xf32> to vector<8x128xf32>
    %130 = arith.mulf %125, %129 : vector<8x128xf32>
    %131 = vector.broadcast %110 : vector<1x128xf32> to vector<8x128xf32>
    %132 = arith.mulf %130, %131 : vector<8x128xf32>
    %133 = vector.broadcast %112 : vector<1x128xf32> to vector<8x128xf32>
    %134 = arith.addf %132, %133 : vector<8x128xf32>
    %135 = arith.truncf %134 : vector<8x128xf32> to vector<8x128xbf16>
    %c0_46 = arith.constant 0 : index
    %c0_47 = arith.constant 0 : index
    %c0_48 = arith.constant 0 : index
    %136 = vector.load %arg9[%c0_46, %c0_47, %c0_48] : memref<1x128x512xbf16, #tpu.memory_space<vmem>>, vector<1x128x512xbf16>
    %137 = vector.shape_cast %136 : vector<1x128x512xbf16> to vector<128x512xbf16>
    %cst_49 = arith.constant dense<0.000000e+00> : vector<8x512xf32>
    %138 = tpu.matmul %135, %137, %cst_49 {dimension_numbers = #tpu.dot_dimension_numbers<[1], [0], [0], [1], [0, 0, 1, 1], [], []>} : vector<8x128xbf16>, vector<128x512xbf16>, vector<8x512xf32> -> vector<8x512xf32>
    %c0_50 = arith.constant 0 : index
    %c0_51 = arith.constant 0 : index
    %c0_52 = arith.constant 0 : index
    %139 = vector.load %arg10[%c0_50, %c0_51, %c0_52] : memref<1x1x512xf32, #tpu.memory_space<vmem>>, vector<1x1x512xf32>
    %140 = vector.shape_cast %139 : vector<1x1x512xf32> to vector<1x512xf32>
    %141 = vector.broadcast %140 : vector<1x512xf32> to vector<8x512xf32>
    %142 = arith.addf %138, %141 : vector<8x512xf32>
    %cst_53 = arith.constant 0.000000e+00 : f32
    %143 = vector.broadcast %cst_53 : f32 to vector<8x512xf32>
    %144 = arith.maximumf %142, %143 : vector<8x512xf32>
    %145 = arith.truncf %144 : vector<8x512xf32> to vector<8x512xbf16>
    %c0_54 = arith.constant 0 : index
    %c0_55 = arith.constant 0 : index
    %c0_56 = arith.constant 0 : index
    %146 = vector.load %arg11[%c0_54, %c0_55, %c0_56] : memref<1x512x128xbf16, #tpu.memory_space<vmem>>, vector<1x512x128xbf16>
    %147 = vector.shape_cast %146 : vector<1x512x128xbf16> to vector<512x128xbf16>
    %cst_57 = arith.constant dense<0.000000e+00> : vector<8x128xf32>
    %148 = tpu.matmul %145, %147, %cst_57 {dimension_numbers = #tpu.dot_dimension_numbers<[1], [0], [0], [1], [0, 0, 1, 1], [], []>} : vector<8x512xbf16>, vector<512x128xbf16>, vector<8x128xf32> -> vector<8x128xf32>
    %c0_58 = arith.constant 0 : index
    %c0_59 = arith.constant 0 : index
    %c0_60 = arith.constant 0 : index
    %149 = vector.load %arg12[%c0_58, %c0_59, %c0_60] : memref<1x1x128xf32, #tpu.memory_space<vmem>>, vector<1x1x128xf32>
    %150 = vector.shape_cast %149 : vector<1x1x128xf32> to vector<1x128xf32>
    %151 = vector.broadcast %150 : vector<1x128xf32> to vector<8x128xf32>
    %152 = arith.addf %148, %151 : vector<8x128xf32>
    %153 = arith.addf %152, %134 : vector<8x128xf32>
    %c0_61 = arith.constant 0 : index
    %c0_62 = arith.constant 0 : index
    %c0_63 = arith.constant 0 : index
    %154 = vector.load %arg13[%c0_61, %c0_62, %c0_63] : memref<1x1x128xf32, #tpu.memory_space<vmem>>, vector<1x1x128xf32>
    %155 = vector.shape_cast %154 : vector<1x1x128xf32> to vector<1x128xf32>
    %c0_64 = arith.constant 0 : index
    %c0_65 = arith.constant 0 : index
    %c0_66 = arith.constant 0 : index
    %156 = vector.load %arg14[%c0_64, %c0_65, %c0_66] : memref<1x1x128xf32, #tpu.memory_space<vmem>>, vector<1x1x128xf32>
    %157 = vector.shape_cast %156 : vector<1x1x128xf32> to vector<1x128xf32>
    %cst_67 = arith.constant dense<0.000000e+00> : vector<8xf32>
    %158 = vector.multi_reduction <add>, %153, %cst_67 [1] : vector<8x128xf32> to vector<8xf32>
    %159 = vector.shape_cast %158 : vector<8xf32> to vector<8x1xf32>
    %cst_68 = arith.constant 1.280000e+02 : f32
    %160 = vector.broadcast %cst_68 : f32 to vector<8x1xf32>
    %161 = arith.divf %159, %160 : vector<8x1xf32>
    %162 = vector.broadcast %161 : vector<8x1xf32> to vector<8x128xf32>
    %163 = arith.subf %153, %162 : vector<8x128xf32>
    %164 = arith.mulf %163, %163 : vector<8x128xf32>
    %cst_69 = arith.constant dense<0.000000e+00> : vector<8xf32>
    %165 = vector.multi_reduction <add>, %164, %cst_69 [1] : vector<8x128xf32> to vector<8xf32>
    %166 = vector.shape_cast %165 : vector<8xf32> to vector<8x1xf32>
    %cst_70 = arith.constant 1.280000e+02 : f32
    %167 = vector.broadcast %cst_70 : f32 to vector<8x1xf32>
    %168 = arith.divf %166, %167 : vector<8x1xf32>
    %169 = vector.broadcast %161 : vector<8x1xf32> to vector<8x128xf32>
    %170 = arith.subf %153, %169 : vector<8x128xf32>
    %cst_71 = arith.constant 9.99999974E-6 : f32
    %171 = vector.broadcast %cst_71 : f32 to vector<8x1xf32>
    %172 = arith.addf %168, %171 : vector<8x1xf32>
    %173 = math.rsqrt %172 : vector<8x1xf32>
    %174 = vector.broadcast %173 : vector<8x1xf32> to vector<8x128xf32>
    %175 = arith.mulf %170, %174 : vector<8x128xf32>
    %176 = vector.broadcast %155 : vector<1x128xf32> to vector<8x128xf32>
    %177 = arith.mulf %175, %176 : vector<8x128xf32>
    %178 = vector.broadcast %157 : vector<1x128xf32> to vector<8x128xf32>
    %179 = arith.addf %177, %178 : vector<8x128xf32>
    %c0_72 = arith.constant 0 : index
    %c0_73 = arith.constant 0 : index
    %180 = vector.load %arg15[%c0_72, %c0_73] : memref<8x128xf32, #tpu.memory_space<vmem>>, vector<8x128xf32>
    tpu.vector_store %arg15[%c0_72, %c0_73], %179 {strides = array<i32>} : memref<8x128xf32, #tpu.memory_space<vmem>>, vector<8x128xf32>,
    return
  }
  func.func @transform_0(%arg0: i32, %arg1: i32) -> (i32, i32) {
    %c0_i32 = arith.constant 0 : i32
    %c0_i32_0 = arith.constant 0 : i32
    return %arg0, %c0_i32 : i32, i32
  }
  func.func @transform_1(%arg0: i32, %arg1: i32) -> (i32, i32, i32) {
    %c0_i32 = arith.constant 0 : i32
    %c0_i32_0 = arith.constant 0 : i32
    %c0_i32_1 = arith.constant 0 : i32
    return %arg1, %c0_i32, %c0_i32_0 : i32, i32, i32
  }
  func.func @transform_2(%arg0: i32, %arg1: i32) -> (i32, i32, i32) {
    %c0_i32 = arith.constant 0 : i32
    %c0_i32_0 = arith.constant 0 : i32
    %c0_i32_1 = arith.constant 0 : i32
    return %arg1, %c0_i32, %c0_i32_0 : i32, i32, i32
  }
  func.func @transform_3(%arg0: i32, %arg1: i32) -> (i32, i32, i32) {
    %c0_i32 = arith.constant 0 : i32
    %c0_i32_0 = arith.constant 0 : i32
    %c0_i32_1 = arith.constant 0 : i32
    return %arg1, %c0_i32, %c0_i32_0 : i32, i32, i32
  }
  func.func @transform_4(%arg0: i32, %arg1: i32) -> (i32, i32, i32) {
    %c0_i32 = arith.constant 0 : i32
    %c0_i32_0 = arith.constant 0 : i32
    %c0_i32_1 = arith.constant 0 : i32
    return %arg1, %c0_i32, %c0_i32_0 : i32, i32, i32
  }
  func.func @transform_5(%arg0: i32, %arg1: i32) -> (i32, i32, i32) {
    %c0_i32 = arith.constant 0 : i32
    %c0_i32_0 = arith.constant 0 : i32
    %c0_i32_1 = arith.constant 0 : i32
    return %arg1, %c0_i32, %c0_i32_0 : i32, i32, i32
  }
  func.func @transform_6(%arg0: i32, %arg1: i32) -> (i32, i32, i32) {
    %c0_i32 = arith.constant 0 : i32
    %c0_i32_0 = arith.constant 0 : i32
    %c0_i32_1 = arith.constant 0 : i32
    return %arg1, %c0_i32, %c0_i32_0 : i32, i32, i32
  }
  func.func @transform_7(%arg0: i32, %arg1: i32) -> (i32, i32, i32) {
    %c0_i32 = arith.constant 0 : i32
    %c0_i32_0 = arith.constant 0 : i32
    %c0_i32_1 = arith.constant 0 : i32
    return %arg1, %c0_i32, %c0_i32_0 : i32, i32, i32
  }
  func.func @transform_8(%arg0: i32, %arg1: i32) -> (i32, i32, i32) {
    %c0_i32 = arith.constant 0 : i32
    %c0_i32_0 = arith.constant 0 : i32
    %c0_i32_1 = arith.constant 0 : i32
    return %arg1, %c0_i32, %c0_i32_0 : i32, i32, i32
  }
  func.func @transform_9(%arg0: i32, %arg1: i32) -> (i32, i32, i32) {
    %c0_i32 = arith.constant 0 : i32
    %c0_i32_0 = arith.constant 0 : i32
    %c0_i32_1 = arith.constant 0 : i32
    return %arg1, %c0_i32, %c0_i32_0 : i32, i32, i32
  }
  func.func @transform_10(%arg0: i32, %arg1: i32) -> (i32, i32, i32) {
    %c0_i32 = arith.constant 0 : i32
    %c0_i32_0 = arith.constant 0 : i32
    %c0_i32_1 = arith.constant 0 : i32
    return %arg1, %c0_i32, %c0_i32_0 : i32, i32, i32
  }
  func.func @transform_11(%arg0: i32, %arg1: i32) -> (i32, i32, i32) {
    %c0_i32 = arith.constant 0 : i32
    %c0_i32_0 = arith.constant 0 : i32
    %c0_i32_1 = arith.constant 0 : i32
    return %arg1, %c0_i32, %c0_i32_0 : i32, i32, i32
  }
  func.func @transform_12(%arg0: i32, %arg1: i32) -> (i32, i32, i32) {
    %c0_i32 = arith.constant 0 : i32
    %c0_i32_0 = arith.constant 0 : i32
    %c0_i32_1 = arith.constant 0 : i32
    return %arg1, %c0_i32, %c0_i32_0 : i32, i32, i32
  }
  func.func @transform_13(%arg0: i32, %arg1: i32) -> (i32, i32) {
    %c0_i32 = arith.constant 0 : i32
    %c0_i32_0 = arith.constant 0 : i32
    return %arg0, %c0_i32 : i32, i32
  }
}

</mosaic_0001>

<llo_original>
// kernel: tpu_custom_call.1
$region0: #{tpu_custom_call.1}
  #allocation0 [shape = 'u32[]', space=smem, size = 0x4, offset = 0x4, fixed_abs, tag = 'smem constant byte address 0x4 - core index']
  #allocation1 [shape = 'u32[144,128]{1,0:T(1,128)}', space=vmem, size = 0x12000, scoped, tag = 'internal scratch']
  %s0 = inlined_call_operand.hbm [shape: f32[16,128], index: 0, kind: input, shape index: {}]
  %s1 = inlined_call_operand.hbm [shape: bf16[2,128,384], index: 1, kind: input, shape index: {}]
  %s2 = inlined_call_operand.vmem [shape: f32[2,1,384], index: 2, kind: input, shape index: {}]
  %s3 = inlined_call_operand.hbm [shape: bf16[2,128,128], index: 3, kind: input, shape index: {}]
  %s4 = inlined_call_operand.hbm [shape: f32[2,1,128], index: 4, kind: input, shape index: {}]
  %s5 = inlined_call_operand.vmem [shape: f32[2,1,128], index: 5, kind: input, shape index: {}]
  %s6 = inlined_call_operand.vmem [shape: f32[2,1,128], index: 6, kind: input, shape index: {}]
  %s7 = inlined_call_operand.hbm [shape: bf16[2,128,512], index: 7, kind: input, shape index: {}]
  %s8 = inlined_call_operand.vmem [shape: f32[2,1,512], index: 8, kind: input, shape index: {}]
  %s9 = inlined_call_operand.hbm [shape: bf16[2,512,128], index: 9, kind: input, shape index: {}]
  %s10 = inlined_call_operand.vmem [shape: f32[2,1,128], index: 10, kind: input, shape index: {}]
  %s11 = inlined_call_operand.vmem [shape: f32[2,1,128], index: 11, kind: input, shape index: {}]
  %s12 = inlined_call_operand.vmem [shape: f32[2,1,128], index: 12, kind: input, shape index: {}]
  %s13 = inlined_call_operand.hbm [shape: f32[16,128], index: 13, kind: output, shape index: {}]
  %s14 = sld [smem:[#allocation0]]
  $region113: #{tpu_custom_call.1} parent=0
    _
  %s16 = ssub.s32 1, %s14
  %s17 = scalar_select 0, %s16, %s14
  $region1: #{tpu_custom_call.1} parent=0
    #allocation2 [shape = 'u8[8192]{0}', space=vmem, size = 0x2000, scoped, tag = 'input window, operand 0']
    #allocation3 [shape = 's32[2]{0}', space=sflag, size = 0x8, scoped, tag = 'scoped memory for tpu_custom_call.1']
    #allocation4 [shape = 's32[2]{0}', space=sflag, size = 0x8, scoped, tag = 'scoped memory for tpu_custom_call.1']
    #allocation5 [shape = 'u8[196608]{0}', space=vmem, size = 0x30000, scoped, tag = 'input window, operand 1']
    #allocation6 [shape = 's32[2]{0}', space=sflag, size = 0x8, scoped, tag = 'scoped memory for tpu_custom_call.1']
    #allocation7 [shape = 'u8[65536]{0}', space=vmem, size = 0x10000, scoped, tag = 'input window, operand 3']
    #allocation8 [shape = 'u8[1024]{0}', space=vmem, size = 0x400, scoped, tag = 'input window, operand 4']
    #allocation9 [shape = 's32[2]{0}', space=sflag, size = 0x8, scoped, tag = 'scoped memory for tpu_custom_call.1']
    #allocation10 [shape = 'u8[262144]{0}', space=vmem, size = 0x40000, scoped, tag = 'input window, operand 7']
    #allocation11 [shape = 'u8[262144]{0}', space=vmem, size = 0x40000, scoped, tag = 'input window, operand 9']
    #allocation12 [shape = 's32[2]{0}', space=sflag, size = 0x8, scoped, tag = 'scoped memory for tpu_custom_call.1']
    #allocation13 [shape = 'u8[8192]{0}', space=vmem, size = 0x2000, scoped, tag = 'output window, operand 0']
    %18 = vsyncpa [#allocation3], 0
    %s19 = scalar_lea.sflag [#allocation3], 1
    %20 = vsyncpa %s19, 0
    %21 = vsyncpa [#allocation6], 0
    %s22 = scalar_lea.sflag [#allocation6], 1
    %23 = vsyncpa %s22, 0
    %24 = vsyncpa [#allocation9], 0
    %s25 = scalar_lea.sflag [#allocation9], 1
    %26 = vsyncpa %s25, 0
    %27 = vsyncpa [#allocation12], 0
    %s28 = scalar_lea.sflag [#allocation12], 1
    %29 = vsyncpa %s28, 0
    %30 = vsyncpa [#allocation4], 0
    %s31 = scalar_lea.sflag [#allocation4], 1
    %32 = vsyncpa %s31, 0
    loop: start=0, step=1, limit=6
    $region2: #{tpu_custom_call.1} parent=1 // loop_pre_header
      _
    $region3: #{tpu_custom_call.1} parent=1 // loop_header
      %s34 = sphi 0, %s38
      %p35 = scmp.ge.s32.totalorder %s34, 6
      %s41 = sphi 0, %s53
      %s42 = sphi 0, %s49
      %s43 = sphi 0, %s41
      %s44 = sphi 0, %s42
      %s45 = sphi 0, %s43
      %s46 = sphi 0, %s44
      %s56 = sphi 0, %s58
      %s59 = sphi 0, %s56
      %s60 = sphi 0, %s59
      %s76 = sphi 0, %s60
      %s82 = sphi 0, %s84
      %s85 = sphi 0, %s82
      %s86 = sphi 0, %s85
      %s102 = sphi 0, %s86
      %s108 = sphi 0, %s110
      %s111 = sphi 0, %s108
      %s112 = sphi 0, %s111
      %s128 = sphi 0, %s112
      %s134 = sphi 0, %s136
      %s137 = sphi 0, %s134
      %s138 = sphi 0, %s137
      %s154 = sphi 0, %s138
      %s160 = sphi 0, %s162
      %s163 = sphi 0, %s160
      %s164 = sphi 0, %s163
      %s180 = sphi 0, %s164
      %s186 = sphi 0, %s188
      %s189 = sphi 0, %s186
      %s190 = sphi 0, %s189
      %s206 = sphi 0, %s190
      %s212 = sphi 0, %s214
      %s215 = sphi 0, %s212
      %s216 = sphi 0, %s215
      %s232 = sphi 0, %s216
      %s238 = sphi 0, %s240
      %s241 = sphi 0, %s238
      %s242 = sphi 0, %s241
      %s258 = sphi 0, %s242
      %s264 = sphi 0, %s266
      %s267 = sphi 0, %s264
      %s268 = sphi 0, %s267
      %s284 = sphi 0, %s268
      %s290 = sphi 0, %s292
      %s293 = sphi 0, %s290
      %s294 = sphi 0, %s293
      %s310 = sphi 0, %s294
      %s316 = sphi 0, %s318
      %s319 = sphi 0, %s316
      %s320 = sphi 0, %s319
      %s336 = sphi 0, %s320
      %s342 = sphi 0, %s344
      %s345 = sphi 0, %s342
      %s346 = sphi 0, %s345
      %s362 = sphi 0, %s346
      %s368 = sphi 0, %s370
      %s371 = sphi 0, %s368
      %s372 = sphi 0, %s371
      %s388 = sphi 0, %s372
      %s394 = sphi 0, %s396
      %s397 = sphi 0, %s394
      %s398 = sphi 0, %s397
      %s414 = sphi 0, %s398
    $region4: #{tpu_custom_call.1} parent=1 // loop_header_branch
      %37 = sbr.rel (%p35) target = $region8
    $region5: #{tpu_custom_call.1} parent=1 // loop_body
      %s39 = ssub.s32 %s34, 1
      %s40 = ssub.s32 %s34, 2
      %s47 = sadd.s32 1, %s42
      %p48 = scmp.ge.s32.totalorder %s47, 2
      %s49 = scalar_select %p48, 0, %s47
      %s50 = sadd.s32 1, %s41
      %s51 = scalar_select %p48, %s50, %s41
      %p52 = scmp.ge.s32.totalorder %s51, 2
      %s53 = scalar_select %p52, 0, %s51
      %s54 = ssub.s32 %s41, %s53
      %p55 = scmp.eq.s32.totalorder %s54, 0
      %s57 = sadd.s32 %s56, 1
      %s58 = scalar_select %p55, %s56, %s57
      %p61 = pneg %p55
      %p62 = scmp.eq.s32.totalorder %s34, 3
      %p63 = por %p61, %p62
      %p64 = scmp.ne.s32.totalorder %s56, %s59
      %p65 = scmp.eq.s32.totalorder %s34, 0
      %p66 = por %p64, %p65
      %p67 = scmp.ne.s32.totalorder %s56, %s59
      %p68 = scmp.eq.s32.totalorder %s39, 3
      %p69 = por %p67, %p68
      %p70 = scmp.ne.s32.totalorder %s59, %s60
      %p71 = scmp.eq.s32.totalorder %s39, 0
      %p72 = por %p70, %p71
      %p73 = scmp.ne.s32.totalorder %s59, %s60
      %p74 = scmp.eq.s32.totalorder %s40, 3
      %p75 = por %p73, %p74
      %p77 = scmp.ne.s32.totalorder %s60, %s76
      %p78 = scmp.eq.s32.totalorder %s40, 0
      %p79 = por %p77, %p78
      %s80 = ssub.s32 %s42, %s49
      %p81 = scmp.eq.s32.totalorder %s80, 0
      %s83 = sadd.s32 %s82, 1
      %s84 = scalar_select %p81, %s82, %s83
      %p87 = pneg %p81
      %p88 = scmp.eq.s32.totalorder %s34, 3
      %p89 = por %p87, %p88
      %p90 = scmp.ne.s32.totalorder %s82, %s85
      %p91 = scmp.eq.s32.totalorder %s34, 0
      %p92 = por %p90, %p91
      %p93 = scmp.ne.s32.totalorder %s82, %s85
      %p94 = scmp.eq.s32.totalorder %s39, 3
      %p95 = por %p93, %p94
      %p96 = scmp.ne.s32.totalorder %s85, %s86
      %p97 = scmp.eq.s32.totalorder %s39, 0
      %p98 = por %p96, %p97
      %p99 = scmp.ne.s32.totalorder %s85, %s86
      %p100 = scmp.eq.s32.totalorder %s40, 3
      %p101 = por %p99, %p100
      %p103 = scmp.ne.s32.totalorder %s86, %s102
      %p104 = scmp.eq.s32.totalorder %s40, 0
      %p105 = por %p103, %p104
      %s106 = ssub.s32 %s42, %s49
      %p107 = scmp.eq.s32.totalorder %s106, 0
      %s109 = sadd.s32 %s108, 1
      %s110 = scalar_select %p107, %s108, %s109
      %p113 = pneg %p107
      %p114 = scmp.eq.s32.totalorder %s34, 3
      %p115 = por %p113, %p114
      %p116 = scmp.ne.s32.totalorder %s108, %s111
      %p117 = scmp.eq.s32.totalorder %s34, 0
      %p118 = por %p116, %p117
      %p119 = scmp.ne.s32.totalorder %s108, %s111
      %p120 = scmp.eq.s32.totalorder %s39, 3
      %p121 = por %p119, %p120
      %p122 = scmp.ne.s32.totalorder %s111, %s112
      %p123 = scmp.eq.s32.totalorder %s39, 0
      %p124 = por %p122, %p123
      %p125 = scmp.ne.s32.totalorder %s111, %s112
      %p126 = scmp.eq.s32.totalorder %s40, 3
      %p127 = por %p125, %p126
      %p129 = scmp.ne.s32.totalorder %s112, %s128
      %p130 = scmp.eq.s32.totalorder %s40, 0
      %p131 = por %p129, %p130
      %s132 = ssub.s32 %s42, %s49
      %p133 = scmp.eq.s32.totalorder %s132, 0
      %s135 = sadd.s32 %s134, 1
      %s136 = scalar_select %p133, %s134, %s135
      %p139 = pneg %p133
      %p140 = scmp.eq.s32.totalorder %s34, 3
      %p141 = por %p139, %p140
      %p142 = scmp.ne.s32.totalorder %s134, %s137
      %p143 = scmp.eq.s32.totalorder %s34, 0
      %p144 = por %p142, %p143
      %p145 = scmp.ne.s32.totalorder %s134, %s137
      %p146 = scmp.eq.s32.totalorder %s39, 3
      %p147 = por %p145, %p146
      %p148 = scmp.ne.s32.totalorder %s137, %s138
      %p149 = scmp.eq.s32.totalorder %s39, 0
      %p150 = por %p148, %p149
      %p151 = scmp.ne.s32.totalorder %s137, %s138
      %p152 = scmp.eq.s32.totalorder %s40, 3
      %p153 = por %p151, %p152
      %p155 = scmp.ne.s32.totalorder %s138, %s154
      %p156 = scmp.eq.s32.totalorder %s40, 0
      %p157 = por %p155, %p156
      %s158 = ssub.s32 %s42, %s49
      %p159 = scmp.eq.s32.totalorder %s158, 0
      %s161 = sadd.s32 %s160, 1
      %s162 = scalar_select %p159, %s160, %s161
      %p165 = pneg %p159
      %p166 = scmp.eq.s32.totalorder %s34, 3
      %p167 = por %p165, %p166
      %p168 = scmp.ne.s32.totalorder %s160, %s163
      %p169 = scmp.eq.s32.totalorder %s34, 0
      %p170 = por %p168, %p169
      %p171 = scmp.ne.s32.totalorder %s160, %s163
      %p172 = scmp.eq.s32.totalorder %s39, 3
      %p173 = por %p171, %p172
      %p174 = scmp.ne.s32.totalorder %s163, %s164
      %p175 = scmp.eq.s32.totalorder %s39, 0
      %p176 = por %p174, %p175
      %p177 = scmp.ne.s32.totalorder %s163, %s164
      %p178 = scmp.eq.s32.totalorder %s40, 3
      %p179 = por %p177, %p178
      %p181 = scmp.ne.s32.totalorder %s164, %s180
      %p182 = scmp.eq.s32.totalorder %s40, 0
      %p183 = por %p181, %p182
      %s184 = ssub.s32 %s42, %s49
      %p185 = scmp.eq.s32.totalorder %s184, 0
      %s187 = sadd.s32 %s186, 1
      %s188 = scalar_select %p185, %s186, %s187
      %p191 = pneg %p185
      %p192 = scmp.eq.s32.totalorder %s34, 3
      %p193 = por %p191, %p192
      %p194 = scmp.ne.s32.totalorder %s186, %s189
      %p195 = scmp.eq.s32.totalorder %s34, 0
      %p196 = por %p194, %p195
      %p197 = scmp.ne.s32.totalorder %s186, %s189
      %p198 = scmp.eq.s32.totalorder %s39, 3
      %p199 = por %p197, %p198
      %p200 = scmp.ne.s32.totalorder %s189, %s190
      %p201 = scmp.eq.s32.totalorder %s39, 0
      %p202 = por %p200, %p201
      %p203 = scmp.ne.s32.totalorder %s189, %s190
      %p204 = scmp.eq.s32.totalorder %s40, 3
      %p205 = por %p203, %p204
      %p207 = scmp.ne.s32.totalorder %s190, %s206
      %p208 = scmp.eq.s32.totalorder %s40, 0
      %p209 = por %p207, %p208
      %s210 = ssub.s32 %s42, %s49
      %p211 = scmp.eq.s32.totalorder %s210, 0
      %s213 = sadd.s32 %s212, 1
      %s214 = scalar_select %p211, %s212, %s213
      %p217 = pneg %p211
      %p218 = scmp.eq.s32.totalorder %s34, 3
      %p219 = por %p217, %p218
      %p220 = scmp.ne.s32.totalorder %s212, %s215
      %p221 = scmp.eq.s32.totalorder %s34, 0
      %p222 = por %p220, %p221
      %p223 = scmp.ne.s32.totalorder %s212, %s215
      %p224 = scmp.eq.s32.totalorder %s39, 3
      %p225 = por %p223, %p224
      %p226 = scmp.ne.s32.totalorder %s215, %s216
      %p227 = scmp.eq.s32.totalorder %s39, 0
      %p228 = por %p226, %p227
      %p229 = scmp.ne.s32.totalorder %s215, %s216
      %p230 = scmp.eq.s32.totalorder %s40, 3
      %p231 = por %p229, %p230
      %p233 = scmp.ne.s32.totalorder %s216, %s232
      %p234 = scmp.eq.s32.totalorder %s40, 0
      %p235 = por %p233, %p234
      %s236 = ssub.s32 %s42, %s49
      %p237 = scmp.eq.s32.totalorder %s236, 0
      %s239 = sadd.s32 %s238, 1
      %s240 = scalar_select %p237, %s238, %s239
      %p243 = pneg %p237
      %p244 = scmp.eq.s32.totalorder %s34, 3
      %p245 = por %p243, %p244
      %p246 = scmp.ne.s32.totalorder %s238, %s241
      %p247 = scmp.eq.s32.totalorder %s34, 0
      %p248 = por %p246, %p247
      %p249 = scmp.ne.s32.totalorder %s238, %s241
      %p250 = scmp.eq.s32.totalorder %s39, 3
      %p251 = por %p249, %p250
      %p252 = scmp.ne.s32.totalorder %s241, %s242
      %p253 = scmp.eq.s32.totalorder %s39, 0
      %p254 = por %p252, %p253
      %p255 = scmp.ne.s32.totalorder %s241, %s242
      %p256 = scmp.eq.s32.totalorder %s40, 3
      %p257 = por %p255, %p256
      %p259 = scmp.ne.s32.totalorder %s242, %s258
      %p260 = scmp.eq.s32.totalorder %s40, 0
      %p261 = por %p259, %p260
      %s262 = ssub.s32 %s42, %s49
      %p263 = scmp.eq.s32.totalorder %s262, 0
      %s265 = sadd.s32 %s264, 1
      %s266 = scalar_select %p263, %s264, %s265
      %p269 = pneg %p263
      %p270 = scmp.eq.s32.totalorder %s34, 3
      %p271 = por %p269, %p270
      %p272 = scmp.ne.s32.totalorder %s264, %s267
      %p273 = scmp.eq.s32.totalorder %s34, 0
      %p274 = por %p272, %p273
      %p275 = scmp.ne.s32.totalorder %s264, %s267
      %p276 = scmp.eq.s32.totalorder %s39, 3
      %p277 = por %p275, %p276
      %p278 = scmp.ne.s32.totalorder %s267, %s268
      %p279 = scmp.eq.s32.totalorder %s39, 0
      %p280 = por %p278, %p279
      %p281 = scmp.ne.s32.totalorder %s267, %s268
      %p282 = scmp.eq.s32.totalorder %s40, 3
      %p283 = por %p281, %p282
      %p285 = scmp.ne.s32.totalorder %s268, %s284
      %p286 = scmp.eq.s32.totalorder %s40, 0
      %p287 = por %p285, %p286
      %s288 = ssub.s32 %s42, %s49
      %p289 = scmp.eq.s32.totalorder %s288, 0
      %s291 = sadd.s32 %s290, 1
      %s292 = scalar_select %p289, %s290, %s291
      %p295 = pneg %p289
      %p296 = scmp.eq.s32.totalorder %s34, 3
      %p297 = por %p295, %p296
      %p298 = scmp.ne.s32.totalorder %s290, %s293
      %p299 = scmp.eq.s32.totalorder %s34, 0
      %p300 = por %p298, %p299
      %p301 = scmp.ne.s32.totalorder %s290, %s293
      %p302 = scmp.eq.s32.totalorder %s39, 3
      %p303 = por %p301, %p302
      %p304 = scmp.ne.s32.totalorder %s293, %s294
      %p305 = scmp.eq.s32.totalorder %s39, 0
      %p306 = por %p304, %p305
      %p307 = scmp.ne.s32.totalorder %s293, %s294
      %p308 = scmp.eq.s32.totalorder %s40, 3
      %p309 = por %p307, %p308
      %p311 = scmp.ne.s32.totalorder %s294, %s310
      %p312 = scmp.eq.s32.totalorder %s40, 0
      %p313 = por %p311, %p312
      %s314 = ssub.s32 %s42, %s49
      %p315 = scmp.eq.s32.totalorder %s314, 0
      %s317 = sadd.s32 %s316, 1
      %s318 = scalar_select %p315, %s316, %s317
      %p321 = pneg %p315
      %p322 = scmp.eq.s32.totalorder %s34, 3
      %p323 = por %p321, %p322
      %p324 = scmp.ne.s32.totalorder %s316, %s319
      %p325 = scmp.eq.s32.totalorder %s34, 0
      %p326 = por %p324, %p325
      %p327 = scmp.ne.s32.totalorder %s316, %s319
      %p328 = scmp.eq.s32.totalorder %s39, 3
      %p329 = por %p327, %p328
      %p330 = scmp.ne.s32.totalorder %s319, %s320
      %p331 = scmp.eq.s32.totalorder %s39, 0
      %p332 = por %p330, %p331
      %p333 = scmp.ne.s32.totalorder %s319, %s320
      %p334 = scmp.eq.s32.totalorder %s40, 3
      %p335 = por %p333, %p334
      %p337 = scmp.ne.s32.totalorder %s320, %s336
      %p338 = scmp.eq.s32.totalorder %s40, 0
      %p339 = por %p337, %p338
      %s340 = ssub.s32 %s42, %s49
      %p341 = scmp.eq.s32.totalorder %s340, 0
      %s343 = sadd.s32 %s342, 1
      %s344 = scalar_select %p341, %s342, %s343
      %p347 = pneg %p341
      %p348 = scmp.eq.s32.totalorder %s34, 3
      %p349 = por %p347, %p348
      %p350 = scmp.ne.s32.totalorder %s342, %s345
      %p351 = scmp.eq.s32.totalorder %s34, 0
      %p352 = por %p350, %p351
      %p353 = scmp.ne.s32.totalorder %s342, %s345
      %p354 = scmp.eq.s32.totalorder %s39, 3
      %p355 = por %p353, %p354
      %p356 = scmp.ne.s32.totalorder %s345, %s346
      %p357 = scmp.eq.s32.totalorder %s39, 0
      %p358 = por %p356, %p357
      %p359 = scmp.ne.s32.totalorder %s345, %s346
      %p360 = scmp.eq.s32.totalorder %s40, 3
      %p361 = por %p359, %p360
      %p363 = scmp.ne.s32.totalorder %s346, %s362
      %p364 = scmp.eq.s32.totalorder %s40, 0
      %p365 = por %p363, %p364
      %s366 = ssub.s32 %s42, %s49
      %p367 = scmp.eq.s32.totalorder %s366, 0
      %s369 = sadd.s32 %s368, 1
      %s370 = scalar_select %p367, %s368, %s369
      %p373 = pneg %p367
      %p374 = scmp.eq.s32.totalorder %s34, 3
      %p375 = por %p373, %p374
      %p376 = scmp.ne.s32.totalorder %s368, %s371
      %p377 = scmp.eq.s32.totalorder %s34, 0
      %p378 = por %p376, %p377
      %p379 = scmp.ne.s32.totalorder %s368, %s371
      %p380 = scmp.eq.s32.totalorder %s39, 3
      %p381 = por %p379, %p380
      %p382 = scmp.ne.s32.totalorder %s371, %s372
      %p383 = scmp.eq.s32.totalorder %s39, 0
      %p384 = por %p382, %p383
      %p385 = scmp.ne.s32.totalorder %s371, %s372
      %p386 = scmp.eq.s32.totalorder %s40, 3
      %p387 = por %p385, %p386
      %p389 = scmp.ne.s32.totalorder %s372, %s388
      %p390 = scmp.eq.s32.totalorder %s40, 0
      %p391 = por %p389, %p390
      %s392 = ssub.s32 %s41, %s53
      %p393 = scmp.eq.s32.totalorder %s392, 0
      %s395 = sadd.s32 %s394, 1
      %s396 = scalar_select %p393, %s394, %s395
      %p399 = pneg %p393
      %p400 = scmp.eq.s32.totalorder %s34, 3
      %p401 = por %p399, %p400
      %p402 = scmp.ne.s32.totalorder %s394, %s397
      %p403 = scmp.eq.s32.totalorder %s34, 0
      %p404 = por %p402, %p403
      %p405 = scmp.ne.s32.totalorder %s394, %s397
      %p406 = scmp.eq.s32.totalorder %s39, 3
      %p407 = por %p405, %p406
      %p408 = scmp.ne.s32.totalorder %s397, %s398
      %p409 = scmp.eq.s32.totalorder %s39, 0
      %p410 = por %p408, %p409
      %p411 = scmp.ne.s32.totalorder %s397, %s398
      %p412 = scmp.eq.s32.totalorder %s40, 3
      %p413 = por %p411, %p412
      %p415 = scmp.ne.s32.totalorder %s398, %s414
      %p416 = scmp.eq.s32.totalorder %s40, 0
      %p417 = por %p415, %p416
      %p418 = scmp.le.s32.totalorder 1, %s34
      %p419 = scmp.lt.s32.totalorder %s34, 5
      %p420 = pnand %p418, %p419
      %p421 = pneg %p420
      // Predicated region
      $region9: #{tpu_custom_call.1} parent=5 // pred_check
        _
      $region10: #{tpu_custom_call.1} parent=5 // pred_check_branch
        %423 = sbr.rel (%p420) target = $region12
      $region11: #{tpu_custom_call.1} parent=5 // pred_region
        %s424 = ssub.s32 %s34, 1
      $region12: #{tpu_custom_call.1} parent=5 // pred_fallthru
        _
      %p425 = scmp.lt.s32.totalorder %s34, 4
      // Predicated region
      $region13: #{tpu_custom_call.1} parent=5 // pred_check
        %p426 = pneg %p425
      $region14: #{tpu_custom_call.1} parent=5 // pred_check_branch
        %428 = sbr.rel (%p426) target = $region16
      $region15: #{tpu_custom_call.1} parent=5 // pred_region
        // Predicated region
        $region17: #{tpu_custom_call.1} parent=15 // pred_check
          %p429 = pneg %p66
        $region18: #{tpu_custom_call.1} parent=15 // pred_check_branch
          %431 = sbr.rel (%p429) target = $region20
        $region19: #{tpu_custom_call.1} parent=15 // pred_region
          %s432 = sand.u32 %s56, 1
          %s433 = scalar_lea.sflag [#allocation3], %s432
          %s434 = sand.u32 %s56, 1
          %s435 = smul.addr %s434, 8
          %s436 = scalar_lea.vmem [#allocation2], %s435
          %s438 = ssub.s32 128, 128
          %439 = vsyncadd %s433, %s438
          %s440 = smul.addr %s41, 128
          %s441 = scalar_lea.hbm %s0, %s440
          %s443 = sshll.u32 %s436, 4
          %s444 = int_to_ptr.vmem [resolvable:$true] %s443
          %446 = dma.hbm_to_vmem [thread:$0]  %s441, 128, %s444, %s433
        $region20: #{tpu_custom_call.1} parent=15 // pred_fallthru
          _
        // Predicated region
        $region21: #{tpu_custom_call.1} parent=15 // pred_check
          %p447 = pneg %p92
        $region22: #{tpu_custom_call.1} parent=15 // pred_check_branch
          %449 = sbr.rel (%p447) target = $region24
        $region23: #{tpu_custom_call.1} parent=15 // pred_region
          %s450 = sand.u32 %s34, 1
          %s451 = scalar_lea.sflag [#allocation6], %s450
          %s452 = sand.u32 %s82, 1
          %s453 = smul.addr %s452, 192
          %s454 = scalar_lea.vmem [#allocation5], %s453
          %s456 = ssub.s32 3072, 3072
          %457 = vsyncadd %s451, %s456
          %s458 = smul.addr %s42, 48
          %s459 = smul.addr %s458, 64
          %s460 = scalar_lea.hbm %s1, %s459
          %s461 = sshll.u32 %s454, 4
          %s462 = int_to_ptr.vmem [resolvable:$true] %s461
          %467 = dma.hbm_to_vmem [thread:$0]  %s460, 3072, %s462, %s451, 192, 192, 12
        $region24: #{tpu_custom_call.1} parent=15 // pred_fallthru
          _
        // Predicated region
        $region25: #{tpu_custom_call.1} parent=15 // pred_check
          %p468 = pneg %p118
        $region26: #{tpu_custom_call.1} parent=15 // pred_check_branch
          %470 = sbr.rel (%p468) target = $region28
        $region27: #{tpu_custom_call.1} parent=15 // pred_region
          %p471 = scmp.lt.s32.totalorder %s42, 1
          %s472 = scalar_select %p471, %s42, 1
          %s473 = smul.addr %s472, 3
          %s474 = scalar_lea.vmem %s2, %s473
        $region28: #{tpu_custom_call.1} parent=15 // pred_fallthru
          _
        // Predicated region
        $region29: #{tpu_custom_call.1} parent=15 // pred_check
          %p475 = pneg %p144
        $region30: #{tpu_custom_call.1} parent=15 // pred_check_branch
          %477 = sbr.rel (%p475) target = $region32
        $region31: #{tpu_custom_call.1} parent=15 // pred_region
          %s478 = sand.u32 %s34, 1
          %s479 = scalar_lea.sflag [#allocation6], %s478
          %s480 = sand.u32 %s134, 1
          %s481 = smul.addr %s480, 64
          %s482 = scalar_lea.vmem [#allocation7], %s481
          %s484 = ssub.s32 1024, 1024
          %485 = vsyncadd %s479, %s484
          %s486 = smul.addr %s42, 16
          %s487 = smul.addr %s486, 64
          %s488 = scalar_lea.hbm %s3, %s487
          %s489 = sshll.u32 %s482, 4
          %s490 = int_to_ptr.vmem [resolvable:$true] %s489
          %495 = dma.hbm_to_vmem [thread:$0]  %s488, 1024, %s490, %s479, 64, 64, 4
        $region32: #{tpu_custom_call.1} parent=15 // pred_fallthru
          _
        // Predicated region
        $region33: #{tpu_custom_call.1} parent=15 // pred_check
          %p496 = pneg %p170
        $region34: #{tpu_custom_call.1} parent=15 // pred_check_branch
          %498 = sbr.rel (%p496) target = $region36
        $region35: #{tpu_custom_call.1} parent=15 // pred_region
          %s499 = sand.u32 %s34, 1
          %s500 = scalar_lea.sflag [#allocation9], %s499
          %s501 = sand.u32 %s160, 1
          %s502 = scalar_lea.vmem [#allocation8], %s501
          %s504 = ssub.s32 16, 16
          %505 = vsyncadd %s500, %s504
          %s506 = smul.addr %s42, 16
          %s507 = scalar_lea.hbm %s4, %s506
          %s509 = sshll.u32 %s502, 4
          %s510 = int_to_ptr.vmem [resolvable:$true] %s509
          %512 = dma.hbm_to_vmem [thread:$0]  %s507, 16, %s510, %s500
        $region36: #{tpu_custom_call.1} parent=15 // pred_fallthru
          _
        // Predicated region
        $region37: #{tpu_custom_call.1} parent=15 // pred_check
          %p513 = pneg %p196
        $region38: #{tpu_custom_call.1} parent=15 // pred_check_branch
          %515 = sbr.rel (%p513) target = $region40
        $region39: #{tpu_custom_call.1} parent=15 // pred_region
          %p516 = scmp.lt.s32.totalorder %s42, 1
          %s517 = scalar_select %p516, %s42, 1
          %s518 = scalar_lea.vmem %s5, %s517
        $region40: #{tpu_custom_call.1} parent=15 // pred_fallthru
          _
        // Predicated region
        $region41: #{tpu_custom_call.1} parent=15 // pred_check
          %p519 = pneg %p222
        $region42: #{tpu_custom_call.1} parent=15 // pred_check_branch
          %521 = sbr.rel (%p519) target = $region44
        $region43: #{tpu_custom_call.1} parent=15 // pred_region
          %p522 = scmp.lt.s32.totalorder %s42, 1
          %s523 = scalar_select %p522, %s42, 1
          %s524 = scalar_lea.vmem %s6, %s523
        $region44: #{tpu_custom_call.1} parent=15 // pred_fallthru
          _
        // Predicated region
        $region45: #{tpu_custom_call.1} parent=15 // pred_check
          %p525 = pneg %p248
        $region46: #{tpu_custom_call.1} parent=15 // pred_check_branch
          %527 = sbr.rel (%p525) target = $region48
        $region47: #{tpu_custom_call.1} parent=15 // pred_region
          %s528 = sand.u32 %s34, 1
          %s529 = scalar_lea.sflag [#allocation9], %s528
          %s530 = sand.u32 %s238, 1
          %s531 = smul.addr %s530, 256
          %s532 = scalar_lea.vmem [#allocation10], %s531
          %s534 = ssub.s32 4096, 4096
          %535 = vsyncadd %s529, %s534
          %s536 = smul.addr %s42, 64
          %s537 = smul.addr %s536, 64
          %s538 = scalar_lea.hbm %s7, %s537
          %s539 = sshll.u32 %s532, 4
          %s540 = int_to_ptr.vmem [resolvable:$true] %s539
          %545 = dma.hbm_to_vmem [thread:$0]  %s538, 4096, %s540, %s529, 256, 256, 16
        $region48: #{tpu_custom_call.1} parent=15 // pred_fallthru
          _
        // Predicated region
        $region49: #{tpu_custom_call.1} parent=15 // pred_check
          %p546 = pneg %p274
        $region50: #{tpu_custom_call.1} parent=15 // pred_check_branch
          %548 = sbr.rel (%p546) target = $region52
        $region51: #{tpu_custom_call.1} parent=15 // pred_region
          %p549 = scmp.lt.s32.totalorder %s42, 1
          %s550 = scalar_select %p549, %s42, 1
          %s551 = smul.addr %s550, 4
          %s552 = scalar_lea.vmem %s8, %s551
        $region52: #{tpu_custom_call.1} parent=15 // pred_fallthru
          _
        // Predicated region
        $region53: #{tpu_custom_call.1} parent=15 // pred_check
          %p553 = pneg %p300
        $region54: #{tpu_custom_call.1} parent=15 // pred_check_branch
          %555 = sbr.rel (%p553) target = $region56
        $region55: #{tpu_custom_call.1} parent=15 // pred_region
          %s556 = sand.u32 %s290, 1
          %s557 = scalar_lea.sflag [#allocation12], %s556
          %s558 = sand.u32 %s290, 1
          %s559 = smul.addr %s558, 256
          %s560 = scalar_lea.vmem [#allocation11], %s559
          %s562 = ssub.s32 4096, 4096
          %563 = vsyncadd %s557, %s562
          %s564 = smul.addr %s42, 64
          %s565 = smul.addr %s564, 64
          %s566 = scalar_lea.hbm %s9, %s565
          %s567 = sshll.u32 %s560, 4
          %s568 = int_to_ptr.vmem [resolvable:$true] %s567
          %573 = dma.hbm_to_vmem [thread:$0]  %s566, 4096, %s568, %s557, 64, 64, 4
        $region56: #{tpu_custom_call.1} parent=15 // pred_fallthru
          _
        // Predicated region
        $region57: #{tpu_custom_call.1} parent=15 // pred_check
          %p574 = pneg %p326
        $region58: #{tpu_custom_call.1} parent=15 // pred_check_branch
          %576 = sbr.rel (%p574) target = $region60
        $region59: #{tpu_custom_call.1} parent=15 // pred_region
          %p577 = scmp.lt.s32.totalorder %s42, 1
          %s578 = scalar_select %p577, %s42, 1
          %s579 = scalar_lea.vmem %s10, %s578
        $region60: #{tpu_custom_call.1} parent=15 // pred_fallthru
          _
        // Predicated region
        $region61: #{tpu_custom_call.1} parent=15 // pred_check
          %p580 = pneg %p352
        $region62: #{tpu_custom_call.1} parent=15 // pred_check_branch
          %582 = sbr.rel (%p580) target = $region64
        $region63: #{tpu_custom_call.1} parent=15 // pred_region
          %p583 = scmp.lt.s32.totalorder %s42, 1
          %s584 = scalar_select %p583, %s42, 1
          %s585 = scalar_lea.vmem %s11, %s584
        $region64: #{tpu_custom_call.1} parent=15 // pred_fallthru
          _
        // Predicated region
        $region65: #{tpu_custom_call.1} parent=15 // pred_check
          %p586 = pneg %p378
        $region66: #{tpu_custom_call.1} parent=15 // pred_check_branch
          %588 = sbr.rel (%p586) target = $region68
        $region67: #{tpu_custom_call.1} parent=15 // pred_region
          %p589 = scmp.lt.s32.totalorder %s42, 1
          %s590 = scalar_select %p589, %s42, 1
          %s591 = scalar_lea.vmem %s12, %s590
        $region68: #{tpu_custom_call.1} parent=15 // pred_fallthru
          _
      $region16: #{tpu_custom_call.1} parent=5 // pred_fallthru
        _
      %p592 = scmp.le.s32.totalorder 1, %s34
      %p593 = scmp.lt.s32.totalorder %s34, 5
      %p594 = pnand %p592, %p593
      %p595 = pneg %p594
      // Predicated region
      $region69: #{tpu_custom_call.1} parent=5 // pred_check
        _
      $region70: #{tpu_custom_call.1} parent=5 // pred_check_branch
        %597 = sbr.rel (%p594) target = $region72
      $region71: #{tpu_custom_call.1} parent=5 // pred_region
        %s598 = ssub.s32 %s34, 1
        %s599 = sand.u32 %s59, 1
        %s600 = scalar_lea.sflag [#allocation3], %s599
        %s601 = sand.u32 %s59, 1
        %s602 = smul.addr %s601, 8
        %s603 = scalar_lea.vmem [#allocation2], %s602
        // Predicated region
        $region73: #{tpu_custom_call.1} parent=71 // pred_check
          %p604 = pneg %p72
        $region74: #{tpu_custom_call.1} parent=71 // pred_check_branch
          %606 = sbr.rel (%p604) target = $region76
        $region75: #{tpu_custom_call.1} parent=71 // pred_region
          %607 = dma.done %s600, 128
        $region76: #{tpu_custom_call.1} parent=71 // pred_fallthru
          _
        %s608 = sand.u32 %s39, 1
        %s609 = scalar_lea.sflag [#allocation6], %s608
        %s610 = sand.u32 %s85, 1
        %s611 = smul.addr %s610, 192
        %s612 = scalar_lea.vmem [#allocation5], %s611
        // Predicated region
        $region77: #{tpu_custom_call.1} parent=71 // pred_check
          %p613 = pneg %p98
        $region78: #{tpu_custom_call.1} parent=71 // pred_check_branch
          %615 = sbr.rel (%p613) target = $region80
        $region79: #{tpu_custom_call.1} parent=71 // pred_region
          %616 = dma.done %s609, 3072
        $region80: #{tpu_custom_call.1} parent=71 // pred_fallthru
          _
        %s617 = sand.u32 %s39, 1
        %s618 = scalar_lea.sflag [#allocation6], %s617
        %s619 = sand.u32 %s137, 1
        %s620 = smul.addr %s619, 64
        %s621 = scalar_lea.vmem [#allocation7], %s620
        // Predicated region
        $region81: #{tpu_custom_call.1} parent=71 // pred_check
          %p622 = pneg %p150
        $region82: #{tpu_custom_call.1} parent=71 // pred_check_branch
          %624 = sbr.rel (%p622) target = $region84
        $region83: #{tpu_custom_call.1} parent=71 // pred_region
          %625 = dma.done %s618, 1024
        $region84: #{tpu_custom_call.1} parent=71 // pred_fallthru
          _
        %s626 = sand.u32 %s39, 1
        %s627 = scalar_lea.sflag [#allocation9], %s626
        %s628 = sand.u32 %s163, 1
        %s629 = scalar_lea.vmem [#allocation8], %s628
        // Predicated region
        $region85: #{tpu_custom_call.1} parent=71 // pred_check
          %p630 = pneg %p176
        $region86: #{tpu_custom_call.1} parent=71 // pred_check_branch
          %632 = sbr.rel (%p630) target = $region88
        $region87: #{tpu_custom_call.1} parent=71 // pred_region
          %633 = dma.done %s627, 16
        $region88: #{tpu_custom_call.1} parent=71 // pred_fallthru
          _
        %s634 = sand.u32 %s39, 1
        %s635 = scalar_lea.sflag [#allocation9], %s634
        %s636 = sand.u32 %s241, 1
        %s637 = smul.addr %s636, 256
        %s638 = scalar_lea.vmem [#allocation10], %s637
        // Predicated region
        $region89: #{tpu_custom_call.1} parent=71 // pred_check
          %p639 = pneg %p254
        $region90: #{tpu_custom_call.1} parent=71 // pred_check_branch
          %641 = sbr.rel (%p639) target = $region92
        $region91: #{tpu_custom_call.1} parent=71 // pred_region
          %642 = dma.done %s635, 4096
        $region92: #{tpu_custom_call.1} parent=71 // pred_fallthru
          _
        %s643 = sand.u32 %s293, 1
        %s644 = scalar_lea.sflag [#allocation12], %s643
        %s645 = sand.u32 %s293, 1
        %s646 = smul.addr %s645, 256
        %s647 = scalar_lea.vmem [#allocation11], %s646
        // Predicated region
        $region93: #{tpu_custom_call.1} parent=71 // pred_check
          %p648 = pneg %p306
        $region94: #{tpu_custom_call.1} parent=71 // pred_check_branch
          %650 = sbr.rel (%p648) target = $region96
        $region95: #{tpu_custom_call.1} parent=71 // pred_region
          %651 = dma.done %s644, 4096
        $region96: #{tpu_custom_call.1} parent=71 // pred_fallthru
          _
        %s652 = sand.u32 %s59, 1
        %s653 = scalar_lea.sflag [#allocation3], %s652
        %s654 = sand.u32 %s59, 1
        %s655 = smul.addr %s654, 8
        %s656 = scalar_lea.vmem [#allocation2], %s655
        %p657 = pneg %p72
        %p658 = pneg %p69
        %s659 = sand.u32 %s39, 1
        %s660 = scalar_lea.sflag [#allocation6], %s659
        %s661 = sand.u32 %s85, 1
        %s662 = smul.addr %s661, 192
        %s663 = scalar_lea.vmem [#allocation5], %s662
        %p664 = pneg %p98
        %p665 = pneg %p95
        %p666 = scmp.lt.s32.totalorder %s44, 1
        %s667 = scalar_select %p666, %s44, 1
        %s668 = smul.addr %s667, 3
        %s669 = scalar_lea.vmem %s2, %s668
        %p670 = pneg %p124
        %p671 = pneg %p121
        %s672 = sand.u32 %s39, 1
        %s673 = scalar_lea.sflag [#allocation6], %s672
        %s674 = sand.u32 %s137, 1
        %s675 = smul.addr %s674, 64
        %s676 = scalar_lea.vmem [#allocation7], %s675
        %p677 = pneg %p150
        %p678 = pneg %p147
        %s679 = sand.u32 %s39, 1
        %s680 = scalar_lea.sflag [#allocation9], %s679
        %s681 = sand.u32 %s163, 1
        %s682 = scalar_lea.vmem [#allocation8], %s681
        %p683 = pneg %p176
        %p684 = pneg %p173
        %p685 = scmp.lt.s32.totalorder %s44, 1
        %s686 = scalar_select %p685, %s44, 1
        %s687 = scalar_lea.vmem %s5, %s686
        %p688 = pneg %p202
        %p689 = pneg %p199
        %p690 = scmp.lt.s32.totalorder %s44, 1
        %s691 = scalar_select %p690, %s44, 1
        %s692 = scalar_lea.vmem %s6, %s691
        %p693 = pneg %p228
        %p694 = pneg %p225
        %s695 = sand.u32 %s39, 1
        %s696 = scalar_lea.sflag [#allocation9], %s695
        %s697 = sand.u32 %s241, 1
        %s698 = smul.addr %s697, 256
        %s699 = scalar_lea.vmem [#allocation10], %s698
        %p700 = pneg %p254
        %p701 = pneg %p251
        %p702 = scmp.lt.s32.totalorder %s44, 1
        %s703 = scalar_select %p702, %s44, 1
        %s704 = smul.addr %s703, 4
        %s705 = scalar_lea.vmem %s8, %s704
        %p706 = pneg %p280
        %p707 = pneg %p277
        %s708 = sand.u32 %s293, 1
        %s709 = scalar_lea.sflag [#allocation12], %s708
        %s710 = sand.u32 %s293, 1
        %s711 = smul.addr %s710, 256
        %s712 = scalar_lea.vmem [#allocation11], %s711
        %p713 = pneg %p306
        %p714 = pneg %p303
        %p715 = scmp.lt.s32.totalorder %s44, 1
        %s716 = scalar_select %p715, %s44, 1
        %s717 = scalar_lea.vmem %s10, %s716
        %p718 = pneg %p332
        %p719 = pneg %p329
        %p720 = scmp.lt.s32.totalorder %s44, 1
        %s721 = scalar_select %p720, %s44, 1
        %s722 = scalar_lea.vmem %s11, %s721
        %p723 = pneg %p358
        %p724 = pneg %p355
        %p725 = scmp.lt.s32.totalorder %s44, 1
        %s726 = scalar_select %p725, %s44, 1
        %s727 = scalar_lea.vmem %s12, %s726
        %p728 = pneg %p384
        %p729 = pneg %p381
        %p730 = pneg %p410
        %p731 = pneg %p407
        %s732 = sand.u32 %s397, 1
        %s733 = scalar_lea.sflag [#allocation4], %s732
        %s734 = sand.u32 %s397, 1
        %s735 = smul.addr %s734, 8
        %s736 = scalar_lea.vmem [#allocation13], %s735
        %p737 = scmp.lt.s32.totalorder %s44, 1
        %s738 = scalar_select %p737, %s44, 1
        %s739 = smul.addr %s738, 3
        %s740 = scalar_lea.vmem %s2, %s739
        %p741 = scmp.lt.s32.totalorder %s44, 1
        %s742 = scalar_select %p741, %s44, 1
        %s743 = scalar_lea.vmem %s5, %s742
        %p744 = scmp.lt.s32.totalorder %s44, 1
        %s745 = scalar_select %p744, %s44, 1
        %s746 = scalar_lea.vmem %s6, %s745
        %p747 = scmp.lt.s32.totalorder %s44, 1
        %s748 = scalar_select %p747, %s44, 1
        %s749 = smul.addr %s748, 4
        %s750 = scalar_lea.vmem %s8, %s749
        %p751 = scmp.lt.s32.totalorder %s44, 1
        %s752 = scalar_select %p751, %s44, 1
        %s753 = scalar_lea.vmem %s10, %s752
        %p754 = scmp.lt.s32.totalorder %s44, 1
        %s755 = scalar_select %p754, %s44, 1
        %s756 = scalar_lea.vmem %s11, %s755
        %p757 = scmp.lt.s32.totalorder %s44, 1
        %s758 = scalar_select %p757, %s44, 1
        %s759 = scalar_lea.vmem %s12, %s758
        %p761 = scmp.eq.s32.totalorder %s44, 0
        // Predicated region
        $region97: #{tpu_custom_call.1} parent=71 // pred_check
          %p762 = pneg %p761
        $region98: #{tpu_custom_call.1} parent=71 // pred_check_branch
          %764 = sbr.rel (%p762) target = $region100
        $region99: #{tpu_custom_call.1} parent=71 // pred_region
          %v765 = vld [vmem:[%s603] sm:$0xff]
          %766 = vst [vmem:[%s736] sm:$0xff] %v765
        $region100: #{tpu_custom_call.1} parent=71 // pred_fallthru
          _
        %v767 = vld [vmem:[%s736] sm:$0xff]
        %v768 = vpack.c.bf16 %v767, %v767
        %v769 = vld [vmem:[%s612] sm:$0xff]
        %v770 = vld [vmem:[%s612 + $0x8] sm:$0xf]
        %v771 = vld [vmem:[%s612 + $0xc] sm:$0xff]
        %v772 = vld [vmem:[%s612 + $0x14] sm:$0xf]
        %v773 = vld [vmem:[%s612 + $0x18] sm:$0xff]
        %v774 = vld [vmem:[%s612 + $0x20] sm:$0xf]
        %v775 = vld [vmem:[%s612 + $0x24] sm:$0xff]
        %v776 = vld [vmem:[%s612 + $0x2c] sm:$0xf]
        %v777 = vld [vmem:[%s612 + $0x30] sm:$0xff]
        %v778 = vld [vmem:[%s612 + $0x38] sm:$0xf]
        %v779 = vld [vmem:[%s612 + $0x3c] sm:$0xff]
        %v780 = vld [vmem:[%s612 + $0x44] sm:$0xf]
        %v781 = vld [vmem:[%s612 + $0x48] sm:$0xff]
        %v782 = vld [vmem:[%s612 + $0x50] sm:$0xf]
        %v783 = vld [vmem:[%s612 + $0x54] sm:$0xff]
        %v784 = vld [vmem:[%s612 + $0x5c] sm:$0xf]
        %v785 = vld [vmem:[%s612 + $0x60] sm:$0xff]
        %v786 = vld [vmem:[%s612 + $0x68] sm:$0xf]
        %v787 = vld [vmem:[%s612 + $0x6c] sm:$0xff]
        %v788 = vld [vmem:[%s612 + $0x74] sm:$0xf]
        %v789 = vld [vmem:[%s612 + $0x78] sm:$0xff]
        %v790 = vld [vmem:[%s612 + $0x80] sm:$0xf]
        %v791 = vld [vmem:[%s612 + $0x84] sm:$0xff]
        %v792 = vld [vmem:[%s612 + $0x8c] sm:$0xf]
        %v793 = vld [vmem:[%s612 + $0x90] sm:$0xff]
        %v794 = vld [vmem:[%s612 + $0x98] sm:$0xf]
        %v795 = vld [vmem:[%s612 + $0x9c] sm:$0xff]
        %v796 = vld [vmem:[%s612 + $0xa4] sm:$0xf]
        %v797 = vld [vmem:[%s612 + $0xa8] sm:$0xff]
        %v798 = vld [vmem:[%s612 + $0xb0] sm:$0xf]
        %v799 = vld [vmem:[%s612 + $0xb4] sm:$0xff]
        %v800 = vld [vmem:[%s612 + $0xbc] sm:$0xf]
        %v801 = vld [vmem:[%s740] sm:$0x7]
        %v803 = vlaneseq
        %v804 = vshrl.u32 %v803, 7
        %v805 = vsub.s32 0, %v804
        %v806 = vrot.slane %v801, %v805
        %v807 = vlaneseq
        %v808 = vshrl.u32 %v807, 7
        %v809 = vsub.s32 1, %v808
        %v810 = vrot.slane %v801, %v809
        %v811 = vlaneseq
        %v812 = vshrl.u32 %v811, 7
        %v813 = vsub.s32 2, %v812
        %v814 = vrot.slane %v801, %v813
        %v850 = vunpack.c.l.b16 %v769
        %v851 = vunpack.c.h.b16 %v769
        %v852 = vunpack.c.l.b16 %v770
        %v853 = vunpack.c.l.b16 %v771
        %v854 = vunpack.c.h.b16 %v771
        %v855 = vunpack.c.l.b16 %v772
        %v856 = vunpack.c.l.b16 %v773
        %v857 = vunpack.c.h.b16 %v773
        %v858 = vunpack.c.l.b16 %v774
        %v859 = vunpack.c.l.b16 %v775
        %v860 = vunpack.c.h.b16 %v775
        %v861 = vunpack.c.l.b16 %v776
        %v862 = vunpack.c.l.b16 %v777
        %v863 = vunpack.c.h.b16 %v777
        %v864 = vunpack.c.l.b16 %v778
        %v865 = vunpack.c.l.b16 %v779
        %v866 = vunpack.c.h.b16 %v779
        %v867 = vunpack.c.l.b16 %v780
        %v868 = vunpack.c.l.b16 %v781
        %v869 = vunpack.c.h.b16 %v781
        %v870 = vunpack.c.l.b16 %v782
        %v871 = vunpack.c.l.b16 %v783
        %v872 = vunpack.c.h.b16 %v783
        %v873 = vunpack.c.l.b16 %v784
        %v874 = vunpack.c.l.b16 %v785
        %v875 = vunpack.c.h.b16 %v785
        %v876 = vunpack.c.l.b16 %v786
        %v877 = vunpack.c.l.b16 %v787
        %v878 = vunpack.c.h.b16 %v787
        %v879 = vunpack.c.l.b16 %v788
        %v880 = vunpack.c.l.b16 %v789
        %v881 = vunpack.c.h.b16 %v789
        %v882 = vunpack.c.l.b16 %v790
        %v883 = vunpack.c.l.b16 %v791
        %v884 = vunpack.c.h.b16 %v791
        %v885 = vunpack.c.l.b16 %v792
        %v886 = vunpack.c.l.b16 %v793
        %v887 = vunpack.c.h.b16 %v793
        %v888 = vunpack.c.l.b16 %v794
        %v889 = vunpack.c.l.b16 %v795
        %v890 = vunpack.c.h.b16 %v795
        %v891 = vunpack.c.l.b16 %v796
        %v892 = vunpack.c.l.b16 %v797
        %v893 = vunpack.c.h.b16 %v797
        %v894 = vunpack.c.l.b16 %v798
        %v895 = vunpack.c.l.b16 %v799
        %v896 = vunpack.c.h.b16 %v799
        %v897 = vunpack.c.l.b16 %v800
        %v898 = vpack.c.b16 %v853, %v850
        %v899 = vpack.c.b16 %v854, %v851
        %v900 = vpack.c.b16 %v855, %v852
        %v901 = vpack.c.b16 %v859, %v856
        %v902 = vpack.c.b16 %v860, %v857
        %v903 = vpack.c.b16 %v861, %v858
        %v904 = vpack.c.b16 %v865, %v862
        %v905 = vpack.c.b16 %v866, %v863
        %v906 = vpack.c.b16 %v867, %v864
        %v907 = vpack.c.b16 %v871, %v868
        %v908 = vpack.c.b16 %v872, %v869
        %v909 = vpack.c.b16 %v873, %v870
        %v910 = vpack.c.b16 %v877, %v874
        %v911 = vpack.c.b16 %v878, %v875
        %v912 = vpack.c.b16 %v879, %v876
        %v913 = vpack.c.b16 %v883, %v880
        %v914 = vpack.c.b16 %v884, %v881
        %v915 = vpack.c.b16 %v885, %v882
        %v916 = vpack.c.b16 %v889, %v886
        %v917 = vpack.c.b16 %v890, %v887
        %v918 = vpack.c.b16 %v891, %v888
        %v919 = vpack.c.b16 %v895, %v892
        %v920 = vpack.c.b16 %v896, %v893
        %v921 = vpack.c.b16 %v897, %v894
        %946 = vmatprep.subr.bf16.mxu0 %v899
        %947 = vmatpush1.bf16.msra.mxu0 %v898
        %948 = vmatprep.subr.bf16.mxu0 %v902
        %949 = vmatpush1.bf16.msra.mxu0 %v901
        %950 = vmatprep.subr.bf16.mxu0 %v905
        %951 = vmatpush1.bf16.msra.mxu0 %v904
        %952 = vmatprep.subr.bf16.mxu0 %v908
        %953 = vmatpush1.bf16.msra.mxu0 %v907
        %954 = vmatprep.subr.bf16.mxu0 %v911
        %955 = vmatpush1.bf16.msra.mxu0 %v910
        %956 = vmatprep.subr.bf16.mxu0 %v914
        %957 = vmatpush1.bf16.msra.mxu0 %v913
        %958 = vmatprep.subr.bf16.mxu0 %v917
        %959 = vmatpush1.bf16.msra.mxu0 %v916
        %960 = vmatprep.subr.bf16.mxu0 %v920
        %961 = vmatpush1.bf16.msra.mxu0 %v919
        %962 = vmatprep.subr.bf16.mxu0 0
        %963 = vmatpush1.bf16.msra.mxu0 0
        %964 = vmatprep.subr.bf16.mxu0 0
        %965 = vmatpush1.bf16.msra.mxu0 0
        %966 = vmatprep.subr.bf16.mxu0 0
        %967 = vmatpush1.bf16.msra.mxu0 0
        %968 = vmatprep.subr.bf16.mxu0 0
        %969 = vmatpush1.bf16.msra.mxu0 0
        %970 = vmatprep.subr.bf16.mxu0 0
        %971 = vmatpush1.bf16.msra.mxu0 0
        %972 = vmatprep.subr.bf16.mxu0 0
        %973 = vmatpush1.bf16.msra.mxu0 0
        %974 = vmatprep.subr.bf16.mxu0 0
        %975 = vmatpush1.bf16.msra.mxu0 0
        %976 = vmatprep.subr.bf16.mxu0 0
        %977 = vmatpush1.bf16.msra.mxu0 0
        %978 = vmatprep.mubr.bf16.mxu0 0
        %979 = vmatmul.mubr.bf16.gmra.mrb[0].mxu0 %v768
        %v980 = vpop.f32.mrb[0].mxu0
        %v981 = vadd.f32 %v806, %v980
        %v982 = vpop.f32.mrb[0].mxu0
        %v983 = vadd.f32 %v810, %v982
        %v984 = vpop.f32.mrb[0].mxu0
        %v985 = vpop.f32.mrb[0].mxu0
        %986 = vdwg.mxu0
        %987 = vmatprep.subr.bf16.mxu0 0
        %988 = vmatpush1.bf16.msra.mxu0 %v900
        %989 = vmatprep.subr.bf16.mxu0 0
        %990 = vmatpush1.bf16.msra.mxu0 %v903
        %991 = vmatprep.subr.bf16.mxu0 0
        %992 = vmatpush1.bf16.msra.mxu0 %v906
        %993 = vmatprep.subr.bf16.mxu0 0
        %994 = vmatpush1.bf16.msra.mxu0 %v909
        %995 = vmatprep.subr.bf16.mxu0 0
        %996 = vmatpush1.bf16.msra.mxu0 %v912
        %997 = vmatprep.subr.bf16.mxu0 0
        %998 = vmatpush1.bf16.msra.mxu0 %v915
        %999 = vmatprep.subr.bf16.mxu0 0
        %1000 = vmatpush1.bf16.msra.mxu0 %v918
        %1001 = vmatprep.subr.bf16.mxu0 0
        %1002 = vmatpush1.bf16.msra.mxu0 %v921
        %1003 = vmatprep.subr.bf16.mxu0 0
        %1004 = vmatpush1.bf16.msra.mxu0 0
        %1005 = vmatprep.subr.bf16.mxu0 0
        %1006 = vmatpush1.bf16.msra.mxu0 0
        %1007 = vmatprep.subr.bf16.mxu0 0
        %1008 = vmatpush1.bf16.msra.mxu0 0
        %1009 = vmatprep.subr.bf16.mxu0 0
        %1010 = vmatpush1.bf16.msra.mxu0 0
        %1011 = vmatprep.subr.bf16.mxu0 0
        %1012 = vmatpush1.bf16.msra.mxu0 0
        %1013 = vmatprep.subr.bf16.mxu0 0
        %1014 = vmatpush1.bf16.msra.mxu0 0
        %1015 = vmatprep.subr.bf16.mxu0 0
        %1016 = vmatpush1.bf16.msra.mxu0 0
        %1017 = vmatprep.subr.bf16.mxu0 0
        %1018 = vmatpush1.bf16.msra.mxu0 0
        %1019 = vmatprep.mubr.bf16.mxu0 0
        %1020 = vmatmul.mubr.bf16.gmra.mrb[0].mxu0 %v768
        %v1021 = vpop.f32.mrb[0].mxu0
        %v1022 = vadd.f32 %v814, %v1021
        %v1023 = vpop.f32.mrb[0].mxu0
        %v1024 = vpop.f32.mrb[0].mxu0
        %v1025 = vpop.f32.mrb[0].mxu0
        %1026 = vdwg.mxu0
        %vm1027 = vcmask 261120
        %v1029 = vsel %vm1027, %v981, 0
        %v1032 = vsel %vm1027, %v983, 0
        %1034 = vmatprep.subr.mxu0 0.0
        %1035 = vmatpush1.xpose.msra.mxu0 %v1032
        %1036 = vmatprep.subr.mxu0 0.0
        %1037 = vmatpush1.xpose.msra.mxu0 0.0
        %1038 = vmatprep.subr.mxu0 0.0
        %1039 = vmatpush1.xpose.msra.mxu0 0.0
        %1040 = vmatprep.subr.mxu0 0.0
        %1041 = vmatpush1.xpose.msra.mxu0 0.0
        %1042 = vmatprep.subr.mxu0 0.0
        %1043 = vmatpush1.xpose.msra.mxu0 0.0
        %1044 = vmatprep.subr.mxu0 0.0
        %1045 = vmatpush1.xpose.msra.mxu0 0.0
        %1046 = vmatprep.subr.mxu0 0.0
        %1047 = vmatpush1.xpose.msra.mxu0 0.0
        %1048 = vmatprep.subr.mxu0 0.0
        %1049 = vmatpush1.xpose.msra.mxu0 0.0
        %1050 = vmatprep.subr.mxu0 0.0
        %1051 = vmatpush1.xpose.msra.mxu0 0.0
        %1052 = vmatprep.subr.mxu0 0.0
        %1053 = vmatpush1.xpose.msra.mxu0 0.0
        %1054 = vmatprep.subr.mxu0 0.0
        %1055 = vmatpush1.xpose.msra.mxu0 0.0
        %1056 = vmatprep.subr.mxu0 0.0
        %1057 = vmatpush1.xpose.msra.mxu0 0.0
        %1058 = vmatprep.subr.mxu0 0.0
        %1059 = vmatpush1.xpose.msra.mxu0 0.0
        %1060 = vmatprep.subr.mxu0 0.0
        %1061 = vmatpush1.xpose.msra.mxu0 0.0
        %1062 = vmatprep.subr.mxu0 0.0
        %1063 = vmatpush1.xpose.msra.mxu0 0.0
        %1064 = vmatprep.subr.mxu0 0.0
        %1065 = vmatpush1.xpose.msra.mxu0 0.0
        %1066 = vmatprep.subr.mxu0 0.0
        %1067 = vmatpush1.xpose.msra.mxu0 0.0
        %1068 = vmatprep.subr.mxu0 0.0
        %1069 = vmatpush1.xpose.msra.mxu0 0.0
        %1070 = vmatprep.subr.mxu0 0.0
        %1071 = vmatpush1.xpose.msra.mxu0 0.0
        %1072 = vmatprep.subr.mxu0 0.0
        %1073 = vmatpush1.xpose.msra.mxu0 0.0
        %1074 = vmatprep.subr.mxu0 0.0
        %1075 = vmatpush1.xpose.msra.mxu0 0.0
        %1076 = vmatprep.subr.mxu0 0.0
        %1077 = vmatpush1.xpose.msra.mxu0 0.0
        %1078 = vmatprep.subr.mxu0 0.0
        %1079 = vmatpush1.xpose.msra.mxu0 0.0
        %1080 = vmatprep.subr.mxu0 0.0
        %1081 = vmatpush1.xpose.msra.mxu0 0.0
        %1082 = vmatprep.subr.mxu0 0.0
        %1083 = vmatpush1.xpose.msra.mxu0 0.0
        %1084 = vmatprep.subr.mxu0 0.0
        %1085 = vmatpush1.xpose.msra.mxu0 0.0
        %1086 = vmatprep.subr.mxu0 0.0
        %1087 = vmatpush1.xpose.msra.mxu0 0.0
        %1088 = vmatprep.subr.mxu0 0.0
        %1089 = vmatpush1.xpose.msra.mxu0 0.0
        %1090 = vmatprep.subr.mxu0 0.0
        %1091 = vmatpush1.xpose.msra.mxu0 0.0
        %1092 = vmatprep.subr.mxu0 0.0
        %1093 = vmatpush1.xpose.msra.mxu0 0.0
        %1094 = vmatprep.subr.mxu0 0.0
        %1095 = vmatpush1.xpose.msra.mxu0 0.0
        %1096 = vmatprep.subr.mxu0 0.0
        %1097 = vmatpush1.xpose.msra.mxu0 0.0
        %1098 = vmatprep.mubr.f32.mxu0 0.0
        %1099 = vmatmul.mubr.f32.gmra.mrb[0].mxu0 %v1029
        %v1100 = vpop.f32.mrb[0].mxu0
        %v1101 = vadd.f32 0.0, %v1100
        %v1102 = vpop.f32.mrb[0].mxu0
        %1103 = vdwg.mxu0
        %v1104 = vmul.f32 %v1101, 0.17677669
        %vm1105 = vcmask 64512
        %v1106 = vsel %vm1105, %v1104, -inf
        %1107 = vmax.xlane.f32.xlu0 %v1106
        %v1108 = vpop.xlane.xlu0 %1107
        %v1109 = vsub.f32 %v1104, %v1108
        %v1110 = vmul.f32 %v1109, 1.442695
        %v1111 = vpow.pop %v1110
        %v1112 = vsel %vm1105, %v1111, 0.0
        %1113 = vadd.xlane.f32.xlu0 %v1112
        %v1114 = vpop.xlane.xlu0 %1113
        %v1115 = vrcp.pop %v1114
        %v1116 = vmul.f32 %v1111, %v1115
        %v1118 = vsel %vm1105, %v1116, 0
        %1120 = vmatprep.subr.mxu0 0.0
        %1121 = vmatpush1.msra.mxu0 %v1022
        %1122 = vmatprep.subr.mxu0 0.0
        %1123 = vmatpush1.msra.mxu0 0.0
        %1124 = vmatprep.subr.mxu0 0.0
        %1125 = vmatpush1.msra.mxu0 0.0
        %1126 = vmatprep.subr.mxu0 0.0
        %1127 = vmatpush1.msra.mxu0 0.0
        %1128 = vmatprep.subr.mxu0 0.0
        %1129 = vmatpush1.msra.mxu0 0.0
        %1130 = vmatprep.subr.mxu0 0.0
        %1131 = vmatpush1.msra.mxu0 0.0
        %1132 = vmatprep.subr.mxu0 0.0
        %1133 = vmatpush1.msra.mxu0 0.0
        %1134 = vmatprep.subr.mxu0 0.0
        %1135 = vmatpush1.msra.mxu0 0.0
        %1136 = vmatprep.subr.mxu0 0.0
        %1137 = vmatpush1.msra.mxu0 0.0
        %1138 = vmatprep.subr.mxu0 0.0
        %1139 = vmatpush1.msra.mxu0 0.0
        %1140 = vmatprep.subr.mxu0 0.0
        %1141 = vmatpush1.msra.mxu0 0.0
        %1142 = vmatprep.subr.mxu0 0.0
        %1143 = vmatpush1.msra.mxu0 0.0
        %1144 = vmatprep.subr.mxu0 0.0
        %1145 = vmatpush1.msra.mxu0 0.0
        %1146 = vmatprep.subr.mxu0 0.0
        %1147 = vmatpush1.msra.mxu0 0.0
        %1148 = vmatprep.subr.mxu0 0.0
        %1149 = vmatpush1.msra.mxu0 0.0
        %1150 = vmatprep.subr.mxu0 0.0
        %1151 = vmatpush1.msra.mxu0 0.0
        %1152 = vmatprep.subr.mxu0 0.0
        %1153 = vmatpush1.msra.mxu0 0.0
        %1154 = vmatprep.subr.mxu0 0.0
        %1155 = vmatpush1.msra.mxu0 0.0
        %1156 = vmatprep.subr.mxu0 0.0
        %1157 = vmatpush1.msra.mxu0 0.0
        %1158 = vmatprep.subr.mxu0 0.0
        %1159 = vmatpush1.msra.mxu0 0.0
        %1160 = vmatprep.subr.mxu0 0.0
        %1161 = vmatpush1.msra.mxu0 0.0
        %1162 = vmatprep.subr.mxu0 0.0
        %1163 = vmatpush1.msra.mxu0 0.0
        %1164 = vmatprep.subr.mxu0 0.0
        %1165 = vmatpush1.msra.mxu0 0.0
        %1166 = vmatprep.subr.mxu0 0.0
        %1167 = vmatpush1.msra.mxu0 0.0
        %1168 = vmatprep.subr.mxu0 0.0
        %1169 = vmatpush1.msra.mxu0 0.0
        %1170 = vmatprep.subr.mxu0 0.0
        %1171 = vmatpush1.msra.mxu0 0.0
        %1172 = vmatprep.subr.mxu0 0.0
        %1173 = vmatpush1.msra.mxu0 0.0
        %1174 = vmatprep.subr.mxu0 0.0
        %1175 = vmatpush1.msra.mxu0 0.0
        %1176 = vmatprep.subr.mxu0 0.0
        %1177 = vmatpush1.msra.mxu0 0.0
        %1178 = vmatprep.subr.mxu0 0.0
        %1179 = vmatpush1.msra.mxu0 0.0
        %1180 = vmatprep.subr.mxu0 0.0
        %1181 = vmatpush1.msra.mxu0 0.0
        %1182 = vmatprep.subr.mxu0 0.0
        %1183 = vmatpush1.msra.mxu0 0.0
        %1184 = vmatprep.mubr.f32.mxu0 0.0
        %1185 = vmatmul.mubr.f32.gmra.mrb[0].mxu0 %v1118
        %v1186 = vpop.f32.mrb[0].mxu0
        %v1187 = vadd.f32 0.0, %v1186
        %v1188 = vpop.f32.mrb[0].mxu0
        %1189 = vdwg.mxu0
        %1190 = vrot.lane.b32.xlu0 %v981, 96
        %v1191 = vpop.permute.xlu0 %1190
        %1192 = vrot.lane.b32.xlu0 %v983, 96
        %v1193 = vpop.permute.xlu0 %1192
        %v1194 = vsel %vm1027, %v1191, 0
        %v1196 = vsel %vm1027, %v1193, 0
        %1198 = vmatprep.subr.mxu0 0.0
        %1199 = vmatpush1.xpose.msra.mxu0 %v1196
        %1200 = vmatprep.subr.mxu0 0.0
        %1201 = vmatpush1.xpose.msra.mxu0 0.0
        %1202 = vmatprep.subr.mxu0 0.0
        %1203 = vmatpush1.xpose.msra.mxu0 0.0
        %1204 = vmatprep.subr.mxu0 0.0
        %1205 = vmatpush1.xpose.msra.mxu0 0.0
        %1206 = vmatprep.subr.mxu0 0.0
        %1207 = vmatpush1.xpose.msra.mxu0 0.0
        %1208 = vmatprep.subr.mxu0 0.0
        %1209 = vmatpush1.xpose.msra.mxu0 0.0
        %1210 = vmatprep.subr.mxu0 0.0
        %1211 = vmatpush1.xpose.msra.mxu0 0.0
        %1212 = vmatprep.subr.mxu0 0.0
        %1213 = vmatpush1.xpose.msra.mxu0 0.0
        %1214 = vmatprep.subr.mxu0 0.0
        %1215 = vmatpush1.xpose.msra.mxu0 0.0
        %1216 = vmatprep.subr.mxu0 0.0
        %1217 = vmatpush1.xpose.msra.mxu0 0.0
        %1218 = vmatprep.subr.mxu0 0.0
        %1219 = vmatpush1.xpose.msra.mxu0 0.0
        %1220 = vmatprep.subr.mxu0 0.0
        %1221 = vmatpush1.xpose.msra.mxu0 0.0
        %1222 = vmatprep.subr.mxu0 0.0
        %1223 = vmatpush1.xpose.msra.mxu0 0.0
        %1224 = vmatprep.subr.mxu0 0.0
        %1225 = vmatpush1.xpose.msra.mxu0 0.0
        %1226 = vmatprep.subr.mxu0 0.0
        %1227 = vmatpush1.xpose.msra.mxu0 0.0
        %1228 = vmatprep.subr.mxu0 0.0
        %1229 = vmatpush1.xpose.msra.mxu0 0.0
        %1230 = vmatprep.subr.mxu0 0.0
        %1231 = vmatpush1.xpose.msra.mxu0 0.0
        %1232 = vmatprep.subr.mxu0 0.0
        %1233 = vmatpush1.xpose.msra.mxu0 0.0
        %1234 = vmatprep.subr.mxu0 0.0
        %1235 = vmatpush1.xpose.msra.mxu0 0.0
        %1236 = vmatprep.subr.mxu0 0.0
        %1237 = vmatpush1.xpose.msra.mxu0 0.0
        %1238 = vmatprep.subr.mxu0 0.0
        %1239 = vmatpush1.xpose.msra.mxu0 0.0
        %1240 = vmatprep.subr.mxu0 0.0
        %1241 = vmatpush1.xpose.msra.mxu0 0.0
        %1242 = vmatprep.subr.mxu0 0.0
        %1243 = vmatpush1.xpose.msra.mxu0 0.0
        %1244 = vmatprep.subr.mxu0 0.0
        %1245 = vmatpush1.xpose.msra.mxu0 0.0
        %1246 = vmatprep.subr.mxu0 0.0
        %1247 = vmatpush1.xpose.msra.mxu0 0.0
        %1248 = vmatprep.subr.mxu0 0.0
        %1249 = vmatpush1.xpose.msra.mxu0 0.0
        %1250 = vmatprep.subr.mxu0 0.0
        %1251 = vmatpush1.xpose.msra.mxu0 0.0
        %1252 = vmatprep.subr.mxu0 0.0
        %1253 = vmatpush1.xpose.msra.mxu0 0.0
        %1254 = vmatprep.subr.mxu0 0.0
        %1255 = vmatpush1.xpose.msra.mxu0 0.0
        %1256 = vmatprep.subr.mxu0 0.0
        %1257 = vmatpush1.xpose.msra.mxu0 0.0
        %1258 = vmatprep.subr.mxu0 0.0
        %1259 = vmatpush1.xpose.msra.mxu0 0.0
        %1260 = vmatprep.subr.mxu0 0.0
        %1261 = vmatpush1.xpose.msra.mxu0 0.0
        %1262 = vmatprep.mubr.f32.mxu0 0.0
        %1263 = vmatmul.mubr.f32.gmra.mrb[0].mxu0 %v1194
        %v1264 = vpop.f32.mrb[0].mxu0
        %v1265 = vadd.f32 0.0, %v1264
        %v1266 = vpop.f32.mrb[0].mxu0
        %1267 = vdwg.mxu0
        %v1268 = vmul.f32 %v1265, 0.17677669
        %v1269 = vsel %vm1105, %v1268, -inf
        %1270 = vmax.xlane.f32.xlu0 %v1269
        %v1271 = vpop.xlane.xlu0 %1270
        %v1272 = vsub.f32 %v1268, %v1271
        %v1273 = vmul.f32 %v1272, 1.442695
        %v1274 = vpow.pop %v1273
        %v1275 = vsel %vm1105, %v1274, 0.0
        %1276 = vadd.xlane.f32.xlu0 %v1275
        %v1277 = vpop.xlane.xlu0 %1276
        %v1278 = vrcp.pop %v1277
        %v1279 = vmul.f32 %v1274, %v1278
        %1281 = vrot.lane.b32.xlu0 %v1022, 96
        %v1282 = vpop.permute.xlu0 %1281
        %v1285 = vsel %vm1105, %v1279, 0
        %1287 = vmatprep.subr.mxu0 0.0
        %1288 = vmatpush1.msra.mxu0 %v1282
        %1289 = vmatprep.subr.mxu0 0.0
        %1290 = vmatpush1.msra.mxu0 0.0
        %1291 = vmatprep.subr.mxu0 0.0
        %1292 = vmatpush1.msra.mxu0 0.0
        %1293 = vmatprep.subr.mxu0 0.0
        %1294 = vmatpush1.msra.mxu0 0.0
        %1295 = vmatprep.subr.mxu0 0.0
        %1296 = vmatpush1.msra.mxu0 0.0
        %1297 = vmatprep.subr.mxu0 0.0
        %1298 = vmatpush1.msra.mxu0 0.0
        %1299 = vmatprep.subr.mxu0 0.0
        %1300 = vmatpush1.msra.mxu0 0.0
        %1301 = vmatprep.subr.mxu0 0.0
        %1302 = vmatpush1.msra.mxu0 0.0
        %1303 = vmatprep.subr.mxu0 0.0
        %1304 = vmatpush1.msra.mxu0 0.0
        %1305 = vmatprep.subr.mxu0 0.0
        %1306 = vmatpush1.msra.mxu0 0.0
        %1307 = vmatprep.subr.mxu0 0.0
        %1308 = vmatpush1.msra.mxu0 0.0
        %1309 = vmatprep.subr.mxu0 0.0
        %1310 = vmatpush1.msra.mxu0 0.0
        %1311 = vmatprep.subr.mxu0 0.0
        %1312 = vmatpush1.msra.mxu0 0.0
        %1313 = vmatprep.subr.mxu0 0.0
        %1314 = vmatpush1.msra.mxu0 0.0
        %1315 = vmatprep.subr.mxu0 0.0
        %1316 = vmatpush1.msra.mxu0 0.0
        %1317 = vmatprep.subr.mxu0 0.0
        %1318 = vmatpush1.msra.mxu0 0.0
        %1319 = vmatprep.subr.mxu0 0.0
        %1320 = vmatpush1.msra.mxu0 0.0
        %1321 = vmatprep.subr.mxu0 0.0
        %1322 = vmatpush1.msra.mxu0 0.0
        %1323 = vmatprep.subr.mxu0 0.0
        %1324 = vmatpush1.msra.mxu0 0.0
        %1325 = vmatprep.subr.mxu0 0.0
        %1326 = vmatpush1.msra.mxu0 0.0
        %1327 = vmatprep.subr.mxu0 0.0
        %1328 = vmatpush1.msra.mxu0 0.0
        %1329 = vmatprep.subr.mxu0 0.0
        %1330 = vmatpush1.msra.mxu0 0.0
        %1331 = vmatprep.subr.mxu0 0.0
        %1332 = vmatpush1.msra.mxu0 0.0
        %1333 = vmatprep.subr.mxu0 0.0
        %1334 = vmatpush1.msra.mxu0 0.0
        %1335 = vmatprep.subr.mxu0 0.0
        %1336 = vmatpush1.msra.mxu0 0.0
        %1337 = vmatprep.subr.mxu0 0.0
        %1338 = vmatpush1.msra.mxu0 0.0
        %1339 = vmatprep.subr.mxu0 0.0
        %1340 = vmatpush1.msra.mxu0 0.0
        %1341 = vmatprep.subr.mxu0 0.0
        %1342 = vmatpush1.msra.mxu0 0.0
        %1343 = vmatprep.subr.mxu0 0.0
        %1344 = vmatpush1.msra.mxu0 0.0
        %1345 = vmatprep.subr.mxu0 0.0
        %1346 = vmatpush1.msra.mxu0 0.0
        %1347 = vmatprep.subr.mxu0 0.0
        %1348 = vmatpush1.msra.mxu0 0.0
        %1349 = vmatprep.subr.mxu0 0.0
        %1350 = vmatpush1.msra.mxu0 0.0
        %1351 = vmatprep.mubr.f32.mxu0 0.0
        %1352 = vmatmul.mubr.f32.gmra.mrb[0].mxu0 %v1285
        %v1353 = vpop.f32.mrb[0].mxu0
        %v1354 = vadd.f32 0.0, %v1353
        %v1355 = vpop.f32.mrb[0].mxu0
        %1356 = vdwg.mxu0
        %1357 = vrot.lane.b32.xlu0 %v981, 64
        %v1358 = vpop.permute.xlu0 %1357
        %1359 = vrot.lane.b32.xlu0 %v983, 64
        %v1360 = vpop.permute.xlu0 %1359
        %v1361 = vsel %vm1027, %v1358, 0
        %v1363 = vsel %vm1027, %v1360, 0
        %1365 = vmatprep.subr.mxu0 0.0
        %1366 = vmatpush1.xpose.msra.mxu0 %v1363
        %1367 = vmatprep.subr.mxu0 0.0
        %1368 = vmatpush1.xpose.msra.mxu0 0.0
        %1369 = vmatprep.subr.mxu0 0.0
        %1370 = vmatpush1.xpose.msra.mxu0 0.0
        %1371 = vmatprep.subr.mxu0 0.0
        %1372 = vmatpush1.xpose.msra.mxu0 0.0
        %1373 = vmatprep.subr.mxu0 0.0
        %1374 = vmatpush1.xpose.msra.mxu0 0.0
        %1375 = vmatprep.subr.mxu0 0.0
        %1376 = vmatpush1.xpose.msra.mxu0 0.0
        %1377 = vmatprep.subr.mxu0 0.0
        %1378 = vmatpush1.xpose.msra.mxu0 0.0
        %1379 = vmatprep.subr.mxu0 0.0
        %1380 = vmatpush1.xpose.msra.mxu0 0.0
        %1381 = vmatprep.subr.mxu0 0.0
        %1382 = vmatpush1.xpose.msra.mxu0 0.0
        %1383 = vmatprep.subr.mxu0 0.0
        %1384 = vmatpush1.xpose.msra.mxu0 0.0
        %1385 = vmatprep.subr.mxu0 0.0
        %1386 = vmatpush1.xpose.msra.mxu0 0.0
        %1387 = vmatprep.subr.mxu0 0.0
        %1388 = vmatpush1.xpose.msra.mxu0 0.0
        %1389 = vmatprep.subr.mxu0 0.0
        %1390 = vmatpush1.xpose.msra.mxu0 0.0
        %1391 = vmatprep.subr.mxu0 0.0
        %1392 = vmatpush1.xpose.msra.mxu0 0.0
        %1393 = vmatprep.subr.mxu0 0.0
        %1394 = vmatpush1.xpose.msra.mxu0 0.0
        %1395 = vmatprep.subr.mxu0 0.0
        %1396 = vmatpush1.xpose.msra.mxu0 0.0
        %1397 = vmatprep.subr.mxu0 0.0
        %1398 = vmatpush1.xpose.msra.mxu0 0.0
        %1399 = vmatprep.subr.mxu0 0.0
        %1400 = vmatpush1.xpose.msra.mxu0 0.0
        %1401 = vmatprep.subr.mxu0 0.0
        %1402 = vmatpush1.xpose.msra.mxu0 0.0
        %1403 = vmatprep.subr.mxu0 0.0
        %1404 = vmatpush1.xpose.msra.mxu0 0.0
        %1405 = vmatprep.subr.mxu0 0.0
        %1406 = vmatpush1.xpose.msra.mxu0 0.0
        %1407 = vmatprep.subr.mxu0 0.0
        %1408 = vmatpush1.xpose.msra.mxu0 0.0
        %1409 = vmatprep.subr.mxu0 0.0
        %1410 = vmatpush1.xpose.msra.mxu0 0.0
        %1411 = vmatprep.subr.mxu0 0.0
        %1412 = vmatpush1.xpose.msra.mxu0 0.0
        %1413 = vmatprep.subr.mxu0 0.0
        %1414 = vmatpush1.xpose.msra.mxu0 0.0
        %1415 = vmatprep.subr.mxu0 0.0
        %1416 = vmatpush1.xpose.msra.mxu0 0.0
        %1417 = vmatprep.subr.mxu0 0.0
        %1418 = vmatpush1.xpose.msra.mxu0 0.0
        %1419 = vmatprep.subr.mxu0 0.0
        %1420 = vmatpush1.xpose.msra.mxu0 0.0
        %1421 = vmatprep.subr.mxu0 0.0
        %1422 = vmatpush1.xpose.msra.mxu0 0.0
        %1423 = vmatprep.subr.mxu0 0.0
        %1424 = vmatpush1.xpose.msra.mxu0 0.0
        %1425 = vmatprep.subr.mxu0 0.0
        %1426 = vmatpush1.xpose.msra.mxu0 0.0
        %1427 = vmatprep.subr.mxu0 0.0
        %1428 = vmatpush1.xpose.msra.mxu0 0.0
        %1429 = vmatprep.mubr.f32.mxu0 0.0
        %1430 = vmatmul.mubr.f32.gmra.mrb[0].mxu0 %v1361
        %v1431 = vpop.f32.mrb[0].mxu0
        %v1432 = vadd.f32 0.0, %v1431
        %v1433 = vpop.f32.mrb[0].mxu0
        %1434 = vdwg.mxu0
        %v1435 = vmul.f32 %v1432, 0.17677669
        %v1436 = vsel %vm1105, %v1435, -inf
        %1437 = vmax.xlane.f32.xlu0 %v1436
        %v1438 = vpop.xlane.xlu0 %1437
        %v1439 = vsub.f32 %v1435, %v1438
        %v1440 = vmul.f32 %v1439, 1.442695
        %v1441 = vpow.pop %v1440
        %v1442 = vsel %vm1105, %v1441, 0.0
        %1443 = vadd.xlane.f32.xlu0 %v1442
        %v1444 = vpop.xlane.xlu0 %1443
        %v1445 = vrcp.pop %v1444
        %v1446 = vmul.f32 %v1441, %v1445
        %1447 = vrot.lane.b32.xlu0 %v1022, 64
        %v1448 = vpop.permute.xlu0 %1447
        %v1451 = vsel %vm1105, %v1446, 0
        %1453 = vmatprep.subr.mxu0 0.0
        %1454 = vmatpush1.msra.mxu0 %v1448
        %1455 = vmatprep.subr.mxu0 0.0
        %1456 = vmatpush1.msra.mxu0 0.0
        %1457 = vmatprep.subr.mxu0 0.0
        %1458 = vmatpush1.msra.mxu0 0.0
        %1459 = vmatprep.subr.mxu0 0.0
        %1460 = vmatpush1.msra.mxu0 0.0
        %1461 = vmatprep.subr.mxu0 0.0
        %1462 = vmatpush1.msra.mxu0 0.0
        %1463 = vmatprep.subr.mxu0 0.0
        %1464 = vmatpush1.msra.mxu0 0.0
        %1465 = vmatprep.subr.mxu0 0.0
        %1466 = vmatpush1.msra.mxu0 0.0
        %1467 = vmatprep.subr.mxu0 0.0
        %1468 = vmatpush1.msra.mxu0 0.0
        %1469 = vmatprep.subr.mxu0 0.0
        %1470 = vmatpush1.msra.mxu0 0.0
        %1471 = vmatprep.subr.mxu0 0.0
        %1472 = vmatpush1.msra.mxu0 0.0
        %1473 = vmatprep.subr.mxu0 0.0
        %1474 = vmatpush1.msra.mxu0 0.0
        %1475 = vmatprep.subr.mxu0 0.0
        %1476 = vmatpush1.msra.mxu0 0.0
        %1477 = vmatprep.subr.mxu0 0.0
        %1478 = vmatpush1.msra.mxu0 0.0
        %1479 = vmatprep.subr.mxu0 0.0
        %1480 = vmatpush1.msra.mxu0 0.0
        %1481 = vmatprep.subr.mxu0 0.0
        %1482 = vmatpush1.msra.mxu0 0.0
        %1483 = vmatprep.subr.mxu0 0.0
        %1484 = vmatpush1.msra.mxu0 0.0
        %1485 = vmatprep.subr.mxu0 0.0
        %1486 = vmatpush1.msra.mxu0 0.0
        %1487 = vmatprep.subr.mxu0 0.0
        %1488 = vmatpush1.msra.mxu0 0.0
        %1489 = vmatprep.subr.mxu0 0.0
        %1490 = vmatpush1.msra.mxu0 0.0
        %1491 = vmatprep.subr.mxu0 0.0
        %1492 = vmatpush1.msra.mxu0 0.0
        %1493 = vmatprep.subr.mxu0 0.0
        %1494 = vmatpush1.msra.mxu0 0.0
        %1495 = vmatprep.subr.mxu0 0.0
        %1496 = vmatpush1.msra.mxu0 0.0
        %1497 = vmatprep.subr.mxu0 0.0
        %1498 = vmatpush1.msra.mxu0 0.0
        %1499 = vmatprep.subr.mxu0 0.0
        %1500 = vmatpush1.msra.mxu0 0.0
        %1501 = vmatprep.subr.mxu0 0.0
        %1502 = vmatpush1.msra.mxu0 0.0
        %1503 = vmatprep.subr.mxu0 0.0
        %1504 = vmatpush1.msra.mxu0 0.0
        %1505 = vmatprep.subr.mxu0 0.0
        %1506 = vmatpush1.msra.mxu0 0.0
        %1507 = vmatprep.subr.mxu0 0.0
        %1508 = vmatpush1.msra.mxu0 0.0
        %1509 = vmatprep.subr.mxu0 0.0
        %1510 = vmatpush1.msra.mxu0 0.0
        %1511 = vmatprep.subr.mxu0 0.0
        %1512 = vmatpush1.msra.mxu0 0.0
        %1513 = vmatprep.subr.mxu0 0.0
        %1514 = vmatpush1.msra.mxu0 0.0
        %1515 = vmatprep.subr.mxu0 0.0
        %1516 = vmatpush1.msra.mxu0 0.0
        %1517 = vmatprep.mubr.f32.mxu0 0.0
        %1518 = vmatmul.mubr.f32.gmra.mrb[0].mxu0 %v1451
        %v1519 = vpop.f32.mrb[0].mxu0
        %v1520 = vadd.f32 0.0, %v1519
        %v1521 = vpop.f32.mrb[0].mxu0
        %1522 = vdwg.mxu0
        %1523 = vrot.lane.b32.xlu0 %v981, 32
        %v1524 = vpop.permute.xlu0 %1523
        %1525 = vrot.lane.b32.xlu0 %v983, 32
        %v1526 = vpop.permute.xlu0 %1525
        %v1527 = vsel %vm1027, %v1524, 0
        %v1529 = vsel %vm1027, %v1526, 0
        %1531 = vmatprep.subr.mxu0 0.0
        %1532 = vmatpush1.xpose.msra.mxu0 %v1529
        %1533 = vmatprep.subr.mxu0 0.0
        %1534 = vmatpush1.xpose.msra.mxu0 0.0
        %1535 = vmatprep.subr.mxu0 0.0
        %1536 = vmatpush1.xpose.msra.mxu0 0.0
        %1537 = vmatprep.subr.mxu0 0.0
        %1538 = vmatpush1.xpose.msra.mxu0 0.0
        %1539 = vmatprep.subr.mxu0 0.0
        %1540 = vmatpush1.xpose.msra.mxu0 0.0
        %1541 = vmatprep.subr.mxu0 0.0
        %1542 = vmatpush1.xpose.msra.mxu0 0.0
        %1543 = vmatprep.subr.mxu0 0.0
        %1544 = vmatpush1.xpose.msra.mxu0 0.0
        %1545 = vmatprep.subr.mxu0 0.0
        %1546 = vmatpush1.xpose.msra.mxu0 0.0
        %1547 = vmatprep.subr.mxu0 0.0
        %1548 = vmatpush1.xpose.msra.mxu0 0.0
        %1549 = vmatprep.subr.mxu0 0.0
        %1550 = vmatpush1.xpose.msra.mxu0 0.0
        %1551 = vmatprep.subr.mxu0 0.0
        %1552 = vmatpush1.xpose.msra.mxu0 0.0
        %1553 = vmatprep.subr.mxu0 0.0
        %1554 = vmatpush1.xpose.msra.mxu0 0.0
        %1555 = vmatprep.subr.mxu0 0.0
        %1556 = vmatpush1.xpose.msra.mxu0 0.0
        %1557 = vmatprep.subr.mxu0 0.0
        %1558 = vmatpush1.xpose.msra.mxu0 0.0
        %1559 = vmatprep.subr.mxu0 0.0
        %1560 = vmatpush1.xpose.msra.mxu0 0.0
        %1561 = vmatprep.subr.mxu0 0.0
        %1562 = vmatpush1.xpose.msra.mxu0 0.0
        %1563 = vmatprep.subr.mxu0 0.0
        %1564 = vmatpush1.xpose.msra.mxu0 0.0
        %1565 = vmatprep.subr.mxu0 0.0
        %1566 = vmatpush1.xpose.msra.mxu0 0.0
        %1567 = vmatprep.subr.mxu0 0.0
        %1568 = vmatpush1.xpose.msra.mxu0 0.0
        %1569 = vmatprep.subr.mxu0 0.0
        %1570 = vmatpush1.xpose.msra.mxu0 0.0
        %1571 = vmatprep.subr.mxu0 0.0
        %1572 = vmatpush1.xpose.msra.mxu0 0.0
        %1573 = vmatprep.subr.mxu0 0.0
        %1574 = vmatpush1.xpose.msra.mxu0 0.0
        %1575 = vmatprep.subr.mxu0 0.0
        %1576 = vmatpush1.xpose.msra.mxu0 0.0
        %1577 = vmatprep.subr.mxu0 0.0
        %1578 = vmatpush1.xpose.msra.mxu0 0.0
        %1579 = vmatprep.subr.mxu0 0.0
        %1580 = vmatpush1.xpose.msra.mxu0 0.0
        %1581 = vmatprep.subr.mxu0 0.0
        %1582 = vmatpush1.xpose.msra.mxu0 0.0
        %1583 = vmatprep.subr.mxu0 0.0
        %1584 = vmatpush1.xpose.msra.mxu0 0.0
        %1585 = vmatprep.subr.mxu0 0.0
        %1586 = vmatpush1.xpose.msra.mxu0 0.0
        %1587 = vmatprep.subr.mxu0 0.0
        %1588 = vmatpush1.xpose.msra.mxu0 0.0
        %1589 = vmatprep.subr.mxu0 0.0
        %1590 = vmatpush1.xpose.msra.mxu0 0.0
        %1591 = vmatprep.subr.mxu0 0.0
        %1592 = vmatpush1.xpose.msra.mxu0 0.0
        %1593 = vmatprep.subr.mxu0 0.0
        %1594 = vmatpush1.xpose.msra.mxu0 0.0
        %1595 = vmatprep.mubr.f32.mxu0 0.0
        %1596 = vmatmul.mubr.f32.gmra.mrb[0].mxu0 %v1527
        %v1597 = vpop.f32.mrb[0].mxu0
        %v1598 = vadd.f32 0.0, %v1597
        %v1599 = vpop.f32.mrb[0].mxu0
        %1600 = vdwg.mxu0
        %v1601 = vmul.f32 %v1598, 0.17677669
        %v1602 = vsel %vm1105, %v1601, -inf
        %1603 = vmax.xlane.f32.xlu0 %v1602
        %v1604 = vpop.xlane.xlu0 %1603
        %v1605 = vsub.f32 %v1601, %v1604
        %v1606 = vmul.f32 %v1605, 1.442695
        %v1607 = vpow.pop %v1606
        %v1608 = vsel %vm1105, %v1607, 0.0
        %1609 = vadd.xlane.f32.xlu0 %v1608
        %v1610 = vpop.xlane.xlu0 %1609
        %v1611 = vrcp.pop %v1610
        %v1612 = vmul.f32 %v1607, %v1611
        %1613 = vrot.lane.b32.xlu0 %v1022, 32
        %v1614 = vpop.permute.xlu0 %1613
        %v1617 = vsel %vm1105, %v1612, 0
        %1619 = vmatprep.subr.mxu0 0.0
        %1620 = vmatpush1.msra.mxu0 %v1614
        %1621 = vmatprep.subr.mxu0 0.0
        %1622 = vmatpush1.msra.mxu0 0.0
        %1623 = vmatprep.subr.mxu0 0.0
        %1624 = vmatpush1.msra.mxu0 0.0
        %1625 = vmatprep.subr.mxu0 0.0
        %1626 = vmatpush1.msra.mxu0 0.0
        %1627 = vmatprep.subr.mxu0 0.0
        %1628 = vmatpush1.msra.mxu0 0.0
        %1629 = vmatprep.subr.mxu0 0.0
        %1630 = vmatpush1.msra.mxu0 0.0
        %1631 = vmatprep.subr.mxu0 0.0
        %1632 = vmatpush1.msra.mxu0 0.0
        %1633 = vmatprep.subr.mxu0 0.0
        %1634 = vmatpush1.msra.mxu0 0.0
        %1635 = vmatprep.subr.mxu0 0.0
        %1636 = vmatpush1.msra.mxu0 0.0
        %1637 = vmatprep.subr.mxu0 0.0
        %1638 = vmatpush1.msra.mxu0 0.0
        %1639 = vmatprep.subr.mxu0 0.0
        %1640 = vmatpush1.msra.mxu0 0.0
        %1641 = vmatprep.subr.mxu0 0.0
        %1642 = vmatpush1.msra.mxu0 0.0
        %1643 = vmatprep.subr.mxu0 0.0
        %1644 = vmatpush1.msra.mxu0 0.0
        %1645 = vmatprep.subr.mxu0 0.0
        %1646 = vmatpush1.msra.mxu0 0.0
        %1647 = vmatprep.subr.mxu0 0.0
        %1648 = vmatpush1.msra.mxu0 0.0
        %1649 = vmatprep.subr.mxu0 0.0
        %1650 = vmatpush1.msra.mxu0 0.0
        %1651 = vmatprep.subr.mxu0 0.0
        %1652 = vmatpush1.msra.mxu0 0.0
        %1653 = vmatprep.subr.mxu0 0.0
        %1654 = vmatpush1.msra.mxu0 0.0
        %1655 = vmatprep.subr.mxu0 0.0
        %1656 = vmatpush1.msra.mxu0 0.0
        %1657 = vmatprep.subr.mxu0 0.0
        %1658 = vmatpush1.msra.mxu0 0.0
        %1659 = vmatprep.subr.mxu0 0.0
        %1660 = vmatpush1.msra.mxu0 0.0
        %1661 = vmatprep.subr.mxu0 0.0
        %1662 = vmatpush1.msra.mxu0 0.0
        %1663 = vmatprep.subr.mxu0 0.0
        %1664 = vmatpush1.msra.mxu0 0.0
        %1665 = vmatprep.subr.mxu0 0.0
        %1666 = vmatpush1.msra.mxu0 0.0
        %1667 = vmatprep.subr.mxu0 0.0
        %1668 = vmatpush1.msra.mxu0 0.0
        %1669 = vmatprep.subr.mxu0 0.0
        %1670 = vmatpush1.msra.mxu0 0.0
        %1671 = vmatprep.subr.mxu0 0.0
        %1672 = vmatpush1.msra.mxu0 0.0
        %1673 = vmatprep.subr.mxu0 0.0
        %1674 = vmatpush1.msra.mxu0 0.0
        %1675 = vmatprep.subr.mxu0 0.0
        %1676 = vmatpush1.msra.mxu0 0.0
        %1677 = vmatprep.subr.mxu0 0.0
        %1678 = vmatpush1.msra.mxu0 0.0
        %1679 = vmatprep.subr.mxu0 0.0
        %1680 = vmatpush1.msra.mxu0 0.0
        %1681 = vmatprep.subr.mxu0 0.0
        %1682 = vmatpush1.msra.mxu0 0.0
        %1683 = vmatprep.mubr.f32.mxu0 0.0
        %1684 = vmatmul.mubr.f32.gmra.mrb[0].mxu0 %v1617
        %v1685 = vpop.f32.mrb[0].mxu0
        %v1686 = vadd.f32 0.0, %v1685
        %v1687 = vpop.f32.mrb[0].mxu0
        %1688 = vdwg.mxu0
        %1690 = vrot.lane.b32.xlu0 %v1354, 32
        %v1691 = vpop.permute.xlu0 %1690
        %1694 = vrot.lane.b32.xlu0 %v1520, 64
        %v1695 = vpop.permute.xlu0 %1694
        %1698 = vrot.lane.b32.xlu0 %v1686, 96
        %v1699 = vpop.permute.xlu0 %1698
        %v1701 = vsel %vm1027, %v1187, %v1691
        %vm1702 = vcmask 523264
        %v1703 = vsel %vm1702, %v1701, %v1695
        %vm1704 = vcmask 785408
        %v1705 = vsel %vm1704, %v1703, %v1699
        %v1706 = vpack.c.bf16 %v1705, %v1705
        %v1707 = vld [vmem:[%s621] sm:$0xf]
        %v1708 = vld [vmem:[%s621 + $0x4] sm:$0xf]
        %v1709 = vld [vmem:[%s621 + $0x8] sm:$0xf]
        %v1710 = vld [vmem:[%s621 + $0xc] sm:$0xf]
        %v1711 = vld [vmem:[%s621 + $0x10] sm:$0xf]
        %v1712 = vld [vmem:[%s621 + $0x14] sm:$0xf]
        %v1713 = vld [vmem:[%s621 + $0x18] sm:$0xf]
        %v1714 = vld [vmem:[%s621 + $0x1c] sm:$0xf]
        %v1715 = vld [vmem:[%s621 + $0x20] sm:$0xf]
        %v1716 = vld [vmem:[%s621 + $0x24] sm:$0xf]
        %v1717 = vld [vmem:[%s621 + $0x28] sm:$0xf]
        %v1718 = vld [vmem:[%s621 + $0x2c] sm:$0xf]
        %v1719 = vld [vmem:[%s621 + $0x30] sm:$0xf]
        %v1720 = vld [vmem:[%s621 + $0x34] sm:$0xf]
        %v1721 = vld [vmem:[%s621 + $0x38] sm:$0xf]
        %v1722 = vld [vmem:[%s621 + $0x3c] sm:$0xf]
        %v1723 = vld [vmem:[%s629] sm:$0x1]
        %v1725 = vlaneseq
        %v1726 = vshrl.u32 %v1725, 7
        %v1727 = vsub.s32 0, %v1726
        %v1728 = vrot.slane %v1723, %v1727
        %v1746 = vunpack.c.l.b16 %v1707
        %v1747 = vunpack.c.l.b16 %v1708
        %v1748 = vunpack.c.l.b16 %v1709
        %v1749 = vunpack.c.l.b16 %v1710
        %v1750 = vunpack.c.l.b16 %v1711
        %v1751 = vunpack.c.l.b16 %v1712
        %v1752 = vunpack.c.l.b16 %v1713
        %v1753 = vunpack.c.l.b16 %v1714
        %v1754 = vunpack.c.l.b16 %v1715
        %v1755 = vunpack.c.l.b16 %v1716
        %v1756 = vunpack.c.l.b16 %v1717
        %v1757 = vunpack.c.l.b16 %v1718
        %v1758 = vunpack.c.l.b16 %v1719
        %v1759 = vunpack.c.l.b16 %v1720
        %v1760 = vunpack.c.l.b16 %v1721
        %v1761 = vunpack.c.l.b16 %v1722
        %v1762 = vpack.c.b16 %v1747, %v1746
        %v1763 = vpack.c.b16 %v1749, %v1748
        %v1764 = vpack.c.b16 %v1751, %v1750
        %v1765 = vpack.c.b16 %v1753, %v1752
        %v1766 = vpack.c.b16 %v1755, %v1754
        %v1767 = vpack.c.b16 %v1757, %v1756
        %v1768 = vpack.c.b16 %v1759, %v1758
        %v1769 = vpack.c.b16 %v1761, %v1760
        %1778 = vmatprep.subr.bf16.mxu0 0
        %1779 = vmatpush1.bf16.msra.mxu0 %v1762
        %1780 = vmatprep.subr.bf16.mxu0 0
        %1781 = vmatpush1.bf16.msra.mxu0 %v1763
        %1782 = vmatprep.subr.bf16.mxu0 0
        %1783 = vmatpush1.bf16.msra.mxu0 %v1764
        %1784 = vmatprep.subr.bf16.mxu0 0
        %1785 = vmatpush1.bf16.msra.mxu0 %v1765
        %1786 = vmatprep.subr.bf16.mxu0 0
        %1787 = vmatpush1.bf16.msra.mxu0 %v1766
        %1788 = vmatprep.subr.bf16.mxu0 0
        %1789 = vmatpush1.bf16.msra.mxu0 %v1767
        %1790 = vmatprep.subr.bf16.mxu0 0
        %1791 = vmatpush1.bf16.msra.mxu0 %v1768
        %1792 = vmatprep.subr.bf16.mxu0 0
        %1793 = vmatpush1.bf16.msra.mxu0 %v1769
        %1794 = vmatprep.subr.bf16.mxu0 0
        %1795 = vmatpush1.bf16.msra.mxu0 0
        %1796 = vmatprep.subr.bf16.mxu0 0
        %1797 = vmatpush1.bf16.msra.mxu0 0
        %1798 = vmatprep.subr.bf16.mxu0 0
        %1799 = vmatpush1.bf16.msra.mxu0 0
        %1800 = vmatprep.subr.bf16.mxu0 0
        %1801 = vmatpush1.bf16.msra.mxu0 0
        %1802 = vmatprep.subr.bf16.mxu0 0
        %1803 = vmatpush1.bf16.msra.mxu0 0
        %1804 = vmatprep.subr.bf16.mxu0 0
        %1805 = vmatpush1.bf16.msra.mxu0 0
        %1806 = vmatprep.subr.bf16.mxu0 0
        %1807 = vmatpush1.bf16.msra.mxu0 0
        %1808 = vmatprep.subr.bf16.mxu0 0
        %1809 = vmatpush1.bf16.msra.mxu0 0
        %1810 = vmatprep.mubr.bf16.mxu0 0
        %1811 = vmatmul.mubr.bf16.gmra.mrb[0].mxu0 %v1706
        %v1812 = vpop.f32.mrb[0].mxu0
        %v1813 = vadd.f32 %v1728, %v1812
        %v1814 = vpop.f32.mrb[0].mxu0
        %v1815 = vpop.f32.mrb[0].mxu0
        %v1816 = vpop.f32.mrb[0].mxu0
        %1817 = vdwg.mxu0
        %v1818 = vadd.f32 %v1813, %v767
        %v1819 = vld [vmem:[%s743] sm:$0x1]
        %v1820 = vld [vmem:[%s746] sm:$0x1]
        %1821 = vadd.xlane.f32.xlu0 %v1818
        %v1822 = vpop.xlane.xlu0 %1821
        %v1823 = vrcp.pop 128.0
        %v1824 = vmul.f32 %v1822, %v1823
        %v1825 = vsub.f32 %v1818, %v1824
        %v1826 = vmul.f32 %v1825, %v1825
        %1827 = vadd.xlane.f32.xlu0 %v1826
        %v1828 = vpop.xlane.xlu0 %1827
        %v1829 = vmul.f32 %v1828, %v1823
        %v1830 = vadd.f32 %v1829, 1e-05
        %v1831 = vrsqrt.pop %v1830
        %v1832 = vmul.f32 %v1825, %v1831
        %v1834 = vlaneseq
        %v1835 = vshrl.u32 %v1834, 7
        %v1836 = vsub.s32 0, %v1835
        %v1837 = vrot.slane %v1819, %v1836
        %v1839 = vmul.f32 %v1832, %v1837
        %v1841 = vlaneseq
        %v1842 = vshrl.u32 %v1841, 7
        %v1843 = vsub.s32 0, %v1842
        %v1844 = vrot.slane %v1820, %v1843
        %v1846 = vadd.f32 %v1839, %v1844
        %v1847 = vpack.c.bf16 %v1846, %v1846
        %v1848 = vld [vmem:[%s638] sm:$0xff]
        %v1849 = vld [vmem:[%s638 + $0x8] sm:$0xff]
        %v1850 = vld [vmem:[%s638 + $0x10] sm:$0xff]
        %v1851 = vld [vmem:[%s638 + $0x18] sm:$0xff]
        %v1852 = vld [vmem:[%s638 + $0x20] sm:$0xff]
        %v1853 = vld [vmem:[%s638 + $0x28] sm:$0xff]
        %v1854 = vld [vmem:[%s638 + $0x30] sm:$0xff]
        %v1855 = vld [vmem:[%s638 + $0x38] sm:$0xff]
        %v1856 = vld [vmem:[%s638 + $0x40] sm:$0xff]
        %v1857 = vld [vmem:[%s638 + $0x48] sm:$0xff]
        %v1858 = vld [vmem:[%s638 + $0x50] sm:$0xff]
        %v1859 = vld [vmem:[%s638 + $0x58] sm:$0xff]
        %v1860 = vld [vmem:[%s638 + $0x60] sm:$0xff]
        %v1861 = vld [vmem:[%s638 + $0x68] sm:$0xff]
        %v1862 = vld [vmem:[%s638 + $0x70] sm:$0xff]
        %v1863 = vld [vmem:[%s638 + $0x78] sm:$0xff]
        %v1864 = vld [vmem:[%s638 + $0x80] sm:$0xff]
        %v1865 = vld [vmem:[%s638 + $0x88] sm:$0xff]
        %v1866 = vld [vmem:[%s638 + $0x90] sm:$0xff]
        %v1867 = vld [vmem:[%s638 + $0x98] sm:$0xff]
        %v1868 = vld [vmem:[%s638 + $0xa0] sm:$0xff]
        %v1869 = vld [vmem:[%s638 + $0xa8] sm:$0xff]
        %v1870 = vld [vmem:[%s638 + $0xb0] sm:$0xff]
        %v1871 = vld [vmem:[%s638 + $0xb8] sm:$0xff]
        %v1872 = vld [vmem:[%s638 + $0xc0] sm:$0xff]
        %v1873 = vld [vmem:[%s638 + $0xc8] sm:$0xff]
        %v1874 = vld [vmem:[%s638 + $0xd0] sm:$0xff]
        %v1875 = vld [vmem:[%s638 + $0xd8] sm:$0xff]
        %v1876 = vld [vmem:[%s638 + $0xe0] sm:$0xff]
        %v1877 = vld [vmem:[%s638 + $0xe8] sm:$0xff]
        %v1878 = vld [vmem:[%s638 + $0xf0] sm:$0xff]
        %v1879 = vld [vmem:[%s638 + $0xf8] sm:$0xff]
        %v1880 = vld [vmem:[%s750] sm:$0xf]
        %v1882 = vlaneseq
        %v1883 = vshrl.u32 %v1882, 7
        %v1884 = vsub.s32 0, %v1883
        %v1885 = vrot.slane %v1880, %v1884
        %v1886 = vlaneseq
        %v1887 = vshrl.u32 %v1886, 7
        %v1888 = vsub.s32 1, %v1887
        %v1889 = vrot.slane %v1880, %v1888
        %v1890 = vlaneseq
        %v1891 = vshrl.u32 %v1890, 7
        %v1892 = vsub.s32 2, %v1891
        %v1893 = vrot.slane %v1880, %v1892
        %v1894 = vlaneseq
        %v1895 = vshrl.u32 %v1894, 7
        %v1896 = vsub.s32 3, %v1895
        %v1897 = vrot.slane %v1880, %v1896
        %v1934 = vunpack.c.l.b16 %v1848
        %v1935 = vunpack.c.h.b16 %v1848
        %v1936 = vunpack.c.l.b16 %v1849
        %v1937 = vunpack.c.h.b16 %v1849
        %v1938 = vunpack.c.l.b16 %v1850
        %v1939 = vunpack.c.h.b16 %v1850
        %v1940 = vunpack.c.l.b16 %v1851
        %v1941 = vunpack.c.h.b16 %v1851
        %v1942 = vunpack.c.l.b16 %v1852
        %v1943 = vunpack.c.h.b16 %v1852
        %v1944 = vunpack.c.l.b16 %v1853
        %v1945 = vunpack.c.h.b16 %v1853
        %v1946 = vunpack.c.l.b16 %v1854
        %v1947 = vunpack.c.h.b16 %v1854
        %v1948 = vunpack.c.l.b16 %v1855
        %v1949 = vunpack.c.h.b16 %v1855
        %v1950 = vunpack.c.l.b16 %v1856
        %v1951 = vunpack.c.h.b16 %v1856
        %v1952 = vunpack.c.l.b16 %v1857
        %v1953 = vunpack.c.h.b16 %v1857
        %v1954 = vunpack.c.l.b16 %v1858
        %v1955 = vunpack.c.h.b16 %v1858
        %v1956 = vunpack.c.l.b16 %v1859
        %v1957 = vunpack.c.h.b16 %v1859
        %v1958 = vunpack.c.l.b16 %v1860
        %v1959 = vunpack.c.h.b16 %v1860
        %v1960 = vunpack.c.l.b16 %v1861
        %v1961 = vunpack.c.h.b16 %v1861
        %v1962 = vunpack.c.l.b16 %v1862
        %v1963 = vunpack.c.h.b16 %v1862
        %v1964 = vunpack.c.l.b16 %v1863
        %v1965 = vunpack.c.h.b16 %v1863
        %v1966 = vunpack.c.l.b16 %v1864
        %v1967 = vunpack.c.h.b16 %v1864
        %v1968 = vunpack.c.l.b16 %v1865
        %v1969 = vunpack.c.h.b16 %v1865
        %v1970 = vunpack.c.l.b16 %v1866
        %v1971 = vunpack.c.h.b16 %v1866
        %v1972 = vunpack.c.l.b16 %v1867
        %v1973 = vunpack.c.h.b16 %v1867
        %v1974 = vunpack.c.l.b16 %v1868
        %v1975 = vunpack.c.h.b16 %v1868
        %v1976 = vunpack.c.l.b16 %v1869
        %v1977 = vunpack.c.h.b16 %v1869
        %v1978 = vunpack.c.l.b16 %v1870
        %v1979 = vunpack.c.h.b16 %v1870
        %v1980 = vunpack.c.l.b16 %v1871
        %v1981 = vunpack.c.h.b16 %v1871
        %v1982 = vunpack.c.l.b16 %v1872
        %v1983 = vunpack.c.h.b16 %v1872
        %v1984 = vunpack.c.l.b16 %v1873
        %v1985 = vunpack.c.h.b16 %v1873
        %v1986 = vunpack.c.l.b16 %v1874
        %v1987 = vunpack.c.h.b16 %v1874
        %v1988 = vunpack.c.l.b16 %v1875
        %v1989 = vunpack.c.h.b16 %v1875
        %v1990 = vunpack.c.l.b16 %v1876
        %v1991 = vunpack.c.h.b16 %v1876
        %v1992 = vunpack.c.l.b16 %v1877
        %v1993 = vunpack.c.h.b16 %v1877
        %v1994 = vunpack.c.l.b16 %v1878
        %v1995 = vunpack.c.h.b16 %v1878
        %v1996 = vunpack.c.l.b16 %v1879
        %v1997 = vunpack.c.h.b16 %v1879
        %v1998 = vpack.c.b16 %v1938, %v1934
        %v1999 = vpack.c.b16 %v1939, %v1935
        %v2000 = vpack.c.b16 %v1940, %v1936
        %v2001 = vpack.c.b16 %v1941, %v1937
        %v2002 = vpack.c.b16 %v1946, %v1942
        %v2003 = vpack.c.b16 %v1947, %v1943
        %v2004 = vpack.c.b16 %v1948, %v1944
        %v2005 = vpack.c.b16 %v1949, %v1945
        %v2006 = vpack.c.b16 %v1954, %v1950
        %v2007 = vpack.c.b16 %v1955, %v1951
        %v2008 = vpack.c.b16 %v1956, %v1952
        %v2009 = vpack.c.b16 %v1957, %v1953
        %v2010 = vpack.c.b16 %v1962, %v1958
        %v2011 = vpack.c.b16 %v1963, %v1959
        %v2012 = vpack.c.b16 %v1964, %v1960
        %v2013 = vpack.c.b16 %v1965, %v1961
        %v2014 = vpack.c.b16 %v1970, %v1966
        %v2015 = vpack.c.b16 %v1971, %v1967
        %v2016 = vpack.c.b16 %v1972, %v1968
        %v2017 = vpack.c.b16 %v1973, %v1969
        %v2018 = vpack.c.b16 %v1978, %v1974
        %v2019 = vpack.c.b16 %v1979, %v1975
        %v2020 = vpack.c.b16 %v1980, %v1976
        %v2021 = vpack.c.b16 %v1981, %v1977
        %v2022 = vpack.c.b16 %v1986, %v1982
        %v2023 = vpack.c.b16 %v1987, %v1983
        %v2024 = vpack.c.b16 %v1988, %v1984
        %v2025 = vpack.c.b16 %v1989, %v1985
        %v2026 = vpack.c.b16 %v1994, %v1990
        %v2027 = vpack.c.b16 %v1995, %v1991
        %v2028 = vpack.c.b16 %v1996, %v1992
        %v2029 = vpack.c.b16 %v1997, %v1993
        %2062 = vmatprep.subr.bf16.mxu0 %v1999
        %2063 = vmatpush1.bf16.msra.mxu0 %v1998
        %2064 = vmatprep.subr.bf16.mxu0 %v2003
        %2065 = vmatpush1.bf16.msra.mxu0 %v2002
        %2066 = vmatprep.subr.bf16.mxu0 %v2007
        %2067 = vmatpush1.bf16.msra.mxu0 %v2006
        %2068 = vmatprep.subr.bf16.mxu0 %v2011
        %2069 = vmatpush1.bf16.msra.mxu0 %v2010
        %2070 = vmatprep.subr.bf16.mxu0 %v2015
        %2071 = vmatpush1.bf16.msra.mxu0 %v2014
        %2072 = vmatprep.subr.bf16.mxu0 %v2019
        %2073 = vmatpush1.bf16.msra.mxu0 %v2018
        %2074 = vmatprep.subr.bf16.mxu0 %v2023
        %2075 = vmatpush1.bf16.msra.mxu0 %v2022
        %2076 = vmatprep.subr.bf16.mxu0 %v2027
        %2077 = vmatpush1.bf16.msra.mxu0 %v2026
        %2078 = vmatprep.subr.bf16.mxu0 0
        %2079 = vmatpush1.bf16.msra.mxu0 0
        %2080 = vmatprep.subr.bf16.mxu0 0
        %2081 = vmatpush1.bf16.msra.mxu0 0
        %2082 = vmatprep.subr.bf16.mxu0 0
        %2083 = vmatpush1.bf16.msra.mxu0 0
        %2084 = vmatprep.subr.bf16.mxu0 0
        %2085 = vmatpush1.bf16.msra.mxu0 0
        %2086 = vmatprep.subr.bf16.mxu0 0
        %2087 = vmatpush1.bf16.msra.mxu0 0
        %2088 = vmatprep.subr.bf16.mxu0 0
        %2089 = vmatpush1.bf16.msra.mxu0 0
        %2090 = vmatprep.subr.bf16.mxu0 0
        %2091 = vmatpush1.bf16.msra.mxu0 0
        %2092 = vmatprep.subr.bf16.mxu0 0
        %2093 = vmatpush1.bf16.msra.mxu0 0
        %2094 = vmatprep.mubr.bf16.mxu0 0
        %2095 = vmatmul.mubr.bf16.gmra.mrb[0].mxu0 %v1847
        %v2096 = vpop.f32.mrb[0].mxu0
        %v2097 = vadd.f32 %v1885, %v2096
        %v2098 = vpop.f32.mrb[0].mxu0
        %v2099 = vadd.f32 %v1889, %v2098
        %v2100 = vpop.f32.mrb[0].mxu0
        %v2101 = vpop.f32.mrb[0].mxu0
        %2102 = vdwg.mxu0
        %2103 = vmatprep.subr.bf16.mxu0 %v2001
        %2104 = vmatpush1.bf16.msra.mxu0 %v2000
        %2105 = vmatprep.subr.bf16.mxu0 %v2005
        %2106 = vmatpush1.bf16.msra.mxu0 %v2004
        %2107 = vmatprep.subr.bf16.mxu0 %v2009
        %2108 = vmatpush1.bf16.msra.mxu0 %v2008
        %2109 = vmatprep.subr.bf16.mxu0 %v2013
        %2110 = vmatpush1.bf16.msra.mxu0 %v2012
        %2111 = vmatprep.subr.bf16.mxu0 %v2017
        %2112 = vmatpush1.bf16.msra.mxu0 %v2016
        %2113 = vmatprep.subr.bf16.mxu0 %v2021
        %2114 = vmatpush1.bf16.msra.mxu0 %v2020
        %2115 = vmatprep.subr.bf16.mxu0 %v2025
        %2116 = vmatpush1.bf16.msra.mxu0 %v2024
        %2117 = vmatprep.subr.bf16.mxu0 %v2029
        %2118 = vmatpush1.bf16.msra.mxu0 %v2028
        %2119 = vmatprep.subr.bf16.mxu0 0
        %2120 = vmatpush1.bf16.msra.mxu0 0
        %2121 = vmatprep.subr.bf16.mxu0 0
        %2122 = vmatpush1.bf16.msra.mxu0 0
        %2123 = vmatprep.subr.bf16.mxu0 0
        %2124 = vmatpush1.bf16.msra.mxu0 0
        %2125 = vmatprep.subr.bf16.mxu0 0
        %2126 = vmatpush1.bf16.msra.mxu0 0
        %2127 = vmatprep.subr.bf16.mxu0 0
        %2128 = vmatpush1.bf16.msra.mxu0 0
        %2129 = vmatprep.subr.bf16.mxu0 0
        %2130 = vmatpush1.bf16.msra.mxu0 0
        %2131 = vmatprep.subr.bf16.mxu0 0
        %2132 = vmatpush1.bf16.msra.mxu0 0
        %2133 = vmatprep.subr.bf16.mxu0 0
        %2134 = vmatpush1.bf16.msra.mxu0 0
        %2135 = vmatprep.mubr.bf16.mxu0 0
        %2136 = vmatmul.mubr.bf16.gmra.mrb[0].mxu0 %v1847
        %v2137 = vpop.f32.mrb[0].mxu0
        %v2138 = vadd.f32 %v1893, %v2137
        %v2139 = vpop.f32.mrb[0].mxu0
        %v2140 = vadd.f32 %v1897, %v2139
        %v2141 = vpop.f32.mrb[0].mxu0
        %v2142 = vpop.f32.mrb[0].mxu0
        %2143 = vdwg.mxu0
        %v2144 = vmax.f32 %v2097, 0.0
        %v2145 = vmax.f32 %v2099, 0.0
        %v2146 = vmax.f32 %v2138, 0.0
        %v2147 = vmax.f32 %v2140, 0.0
        %v2148 = vpack.c.bf16 %v2144, %v2144
        %v2149 = vpack.c.bf16 %v2145, %v2145
        %v2150 = vpack.c.bf16 %v2146, %v2146
        %v2151 = vpack.c.bf16 %v2147, %v2147
        %v2152 = vld [vmem:[%s647] sm:$0xf]
        %v2153 = vld [vmem:[%s647 + $0x4] sm:$0xf]
        %v2154 = vld [vmem:[%s647 + $0x8] sm:$0xf]
        %v2155 = vld [vmem:[%s647 + $0xc] sm:$0xf]
        %v2156 = vld [vmem:[%s647 + $0x10] sm:$0xf]
        %v2157 = vld [vmem:[%s647 + $0x14] sm:$0xf]
        %v2158 = vld [vmem:[%s647 + $0x18] sm:$0xf]
        %v2159 = vld [vmem:[%s647 + $0x1c] sm:$0xf]
        %v2160 = vld [vmem:[%s647 + $0x20] sm:$0xf]
        %v2161 = vld [vmem:[%s647 + $0x24] sm:$0xf]
        %v2162 = vld [vmem:[%s647 + $0x28] sm:$0xf]
        %v2163 = vld [vmem:[%s647 + $0x2c] sm:$0xf]
        %v2164 = vld [vmem:[%s647 + $0x30] sm:$0xf]
        %v2165 = vld [vmem:[%s647 + $0x34] sm:$0xf]
        %v2166 = vld [vmem:[%s647 + $0x38] sm:$0xf]
        %v2167 = vld [vmem:[%s647 + $0x3c] sm:$0xf]
        %v2168 = vld [vmem:[%s647 + $0x40] sm:$0xf]
        %v2169 = vld [vmem:[%s647 + $0x44] sm:$0xf]
        %v2170 = vld [vmem:[%s647 + $0x48] sm:$0xf]
        %v2171 = vld [vmem:[%s647 + $0x4c] sm:$0xf]
        %v2172 = vld [vmem:[%s647 + $0x50] sm:$0xf]
        %v2173 = vld [vmem:[%s647 + $0x54] sm:$0xf]
        %v2174 = vld [vmem:[%s647 + $0x58] sm:$0xf]
        %v2175 = vld [vmem:[%s647 + $0x5c] sm:$0xf]
        %v2176 = vld [vmem:[%s647 + $0x60] sm:$0xf]
        %v2177 = vld [vmem:[%s647 + $0x64] sm:$0xf]
        %v2178 = vld [vmem:[%s647 + $0x68] sm:$0xf]
        %v2179 = vld [vmem:[%s647 + $0x6c] sm:$0xf]
        %v2180 = vld [vmem:[%s647 + $0x70] sm:$0xf]
        %v2181 = vld [vmem:[%s647 + $0x74] sm:$0xf]
        %v2182 = vld [vmem:[%s647 + $0x78] sm:$0xf]
        %v2183 = vld [vmem:[%s647 + $0x7c] sm:$0xf]
        %v2184 = vld [vmem:[%s647 + $0x80] sm:$0xf]
        %v2185 = vld [vmem:[%s647 + $0x84] sm:$0xf]
        %v2186 = vld [vmem:[%s647 + $0x88] sm:$0xf]
        %v2187 = vld [vmem:[%s647 + $0x8c] sm:$0xf]
        %v2188 = vld [vmem:[%s647 + $0x90] sm:$0xf]
        %v2189 = vld [vmem:[%s647 + $0x94] sm:$0xf]
        %v2190 = vld [vmem:[%s647 + $0x98] sm:$0xf]
        %v2191 = vld [vmem:[%s647 + $0x9c] sm:$0xf]
        %v2192 = vld [vmem:[%s647 + $0xa0] sm:$0xf]
        %v2193 = vld [vmem:[%s647 + $0xa4] sm:$0xf]
        %v2194 = vld [vmem:[%s647 + $0xa8] sm:$0xf]
        %v2195 = vld [vmem:[%s647 + $0xac] sm:$0xf]
        %v2196 = vld [vmem:[%s647 + $0xb0] sm:$0xf]
        %v2197 = vld [vmem:[%s647 + $0xb4] sm:$0xf]
        %v2198 = vld [vmem:[%s647 + $0xb8] sm:$0xf]
        %v2199 = vld [vmem:[%s647 + $0xbc] sm:$0xf]
        %v2200 = vld [vmem:[%s647 + $0xc0] sm:$0xf]
        %v2201 = vld [vmem:[%s647 + $0xc4] sm:$0xf]
        %v2202 = vld [vmem:[%s647 + $0xc8] sm:$0xf]
        %v2203 = vld [vmem:[%s647 + $0xcc] sm:$0xf]
        %v2204 = vld [vmem:[%s647 + $0xd0] sm:$0xf]
        %v2205 = vld [vmem:[%s647 + $0xd4] sm:$0xf]
        %v2206 = vld [vmem:[%s647 + $0xd8] sm:$0xf]
        %v2207 = vld [vmem:[%s647 + $0xdc] sm:$0xf]
        %v2208 = vld [vmem:[%s647 + $0xe0] sm:$0xf]
        %v2209 = vld [vmem:[%s647 + $0xe4] sm:$0xf]
        %v2210 = vld [vmem:[%s647 + $0xe8] sm:$0xf]
        %v2211 = vld [vmem:[%s647 + $0xec] sm:$0xf]
        %v2212 = vld [vmem:[%s647 + $0xf0] sm:$0xf]
        %v2213 = vld [vmem:[%s647 + $0xf4] sm:$0xf]
        %v2214 = vld [vmem:[%s647 + $0xf8] sm:$0xf]
        %v2215 = vld [vmem:[%s647 + $0xfc] sm:$0xf]
        %v2216 = vld [vmem:[%s753] sm:$0x1]
        %v2218 = vlaneseq
        %v2219 = vshrl.u32 %v2218, 7
        %v2220 = vsub.s32 0, %v2219
        %v2221 = vrot.slane %v2216, %v2220
        %v2287 = vunpack.c.l.b16 %v2152
        %v2288 = vunpack.c.l.b16 %v2153
        %v2289 = vunpack.c.l.b16 %v2154
        %v2290 = vunpack.c.l.b16 %v2155
        %v2291 = vunpack.c.l.b16 %v2156
        %v2292 = vunpack.c.l.b16 %v2157
        %v2293 = vunpack.c.l.b16 %v2158
        %v2294 = vunpack.c.l.b16 %v2159
        %v2295 = vunpack.c.l.b16 %v2160
        %v2296 = vunpack.c.l.b16 %v2161
        %v2297 = vunpack.c.l.b16 %v2162
        %v2298 = vunpack.c.l.b16 %v2163
        %v2299 = vunpack.c.l.b16 %v2164
        %v2300 = vunpack.c.l.b16 %v2165
        %v2301 = vunpack.c.l.b16 %v2166
        %v2302 = vunpack.c.l.b16 %v2167
        %v2303 = vunpack.c.l.b16 %v2168
        %v2304 = vunpack.c.l.b16 %v2169
        %v2305 = vunpack.c.l.b16 %v2170
        %v2306 = vunpack.c.l.b16 %v2171
        %v2307 = vunpack.c.l.b16 %v2172
        %v2308 = vunpack.c.l.b16 %v2173
        %v2309 = vunpack.c.l.b16 %v2174
        %v2310 = vunpack.c.l.b16 %v2175
        %v2311 = vunpack.c.l.b16 %v2176
        %v2312 = vunpack.c.l.b16 %v2177
        %v2313 = vunpack.c.l.b16 %v2178
        %v2314 = vunpack.c.l.b16 %v2179
        %v2315 = vunpack.c.l.b16 %v2180
        %v2316 = vunpack.c.l.b16 %v2181
        %v2317 = vunpack.c.l.b16 %v2182
        %v2318 = vunpack.c.l.b16 %v2183
        %v2319 = vunpack.c.l.b16 %v2184
        %v2320 = vunpack.c.l.b16 %v2185
        %v2321 = vunpack.c.l.b16 %v2186
        %v2322 = vunpack.c.l.b16 %v2187
        %v2323 = vunpack.c.l.b16 %v2188
        %v2324 = vunpack.c.l.b16 %v2189
        %v2325 = vunpack.c.l.b16 %v2190
        %v2326 = vunpack.c.l.b16 %v2191
        %v2327 = vunpack.c.l.b16 %v2192
        %v2328 = vunpack.c.l.b16 %v2193
        %v2329 = vunpack.c.l.b16 %v2194
        %v2330 = vunpack.c.l.b16 %v2195
        %v2331 = vunpack.c.l.b16 %v2196
        %v2332 = vunpack.c.l.b16 %v2197
        %v2333 = vunpack.c.l.b16 %v2198
        %v2334 = vunpack.c.l.b16 %v2199
        %v2335 = vunpack.c.l.b16 %v2200
        %v2336 = vunpack.c.l.b16 %v2201
        %v2337 = vunpack.c.l.b16 %v2202
        %v2338 = vunpack.c.l.b16 %v2203
        %v2339 = vunpack.c.l.b16 %v2204
        %v2340 = vunpack.c.l.b16 %v2205
        %v2341 = vunpack.c.l.b16 %v2206
        %v2342 = vunpack.c.l.b16 %v2207
        %v2343 = vunpack.c.l.b16 %v2208
        %v2344 = vunpack.c.l.b16 %v2209
        %v2345 = vunpack.c.l.b16 %v2210
        %v2346 = vunpack.c.l.b16 %v2211
        %v2347 = vunpack.c.l.b16 %v2212
        %v2348 = vunpack.c.l.b16 %v2213
        %v2349 = vunpack.c.l.b16 %v2214
        %v2350 = vunpack.c.l.b16 %v2215
        %v2351 = vpack.c.b16 %v2288, %v2287
        %v2352 = vpack.c.b16 %v2290, %v2289
        %v2353 = vpack.c.b16 %v2292, %v2291
        %v2354 = vpack.c.b16 %v2294, %v2293
        %v2355 = vpack.c.b16 %v2296, %v2295
        %v2356 = vpack.c.b16 %v2298, %v2297
        %v2357 = vpack.c.b16 %v2300, %v2299
        %v2358 = vpack.c.b16 %v2302, %v2301
        %v2359 = vpack.c.b16 %v2304, %v2303
        %v2360 = vpack.c.b16 %v2306, %v2305
        %v2361 = vpack.c.b16 %v2308, %v2307
        %v2362 = vpack.c.b16 %v2310, %v2309
        %v2363 = vpack.c.b16 %v2312, %v2311
        %v2364 = vpack.c.b16 %v2314, %v2313
        %v2365 = vpack.c.b16 %v2316, %v2315
        %v2366 = vpack.c.b16 %v2318, %v2317
        %v2367 = vpack.c.b16 %v2320, %v2319
        %v2368 = vpack.c.b16 %v2322, %v2321
        %v2369 = vpack.c.b16 %v2324, %v2323
        %v2370 = vpack.c.b16 %v2326, %v2325
        %v2371 = vpack.c.b16 %v2328, %v2327
        %v2372 = vpack.c.b16 %v2330, %v2329
        %v2373 = vpack.c.b16 %v2332, %v2331
        %v2374 = vpack.c.b16 %v2334, %v2333
        %v2375 = vpack.c.b16 %v2336, %v2335
        %v2376 = vpack.c.b16 %v2338, %v2337
        %v2377 = vpack.c.b16 %v2340, %v2339
        %v2378 = vpack.c.b16 %v2342, %v2341
        %v2379 = vpack.c.b16 %v2344, %v2343
        %v2380 = vpack.c.b16 %v2346, %v2345
        %v2381 = vpack.c.b16 %v2348, %v2347
        %v2382 = vpack.c.b16 %v2350, %v2349
        %2415 = vmatprep.subr.bf16.mxu0 0
        %2416 = vmatpush1.bf16.msra.mxu0 %v2351
        %2417 = vmatprep.subr.bf16.mxu0 0
        %2418 = vmatpush1.bf16.msra.mxu0 %v2352
        %2419 = vmatprep.subr.bf16.mxu0 0
        %2420 = vmatpush1.bf16.msra.mxu0 %v2353
        %2421 = vmatprep.subr.bf16.mxu0 0
        %2422 = vmatpush1.bf16.msra.mxu0 %v2354
        %2423 = vmatprep.subr.bf16.mxu0 0
        %2424 = vmatpush1.bf16.msra.mxu0 %v2355
        %2425 = vmatprep.subr.bf16.mxu0 0
        %2426 = vmatpush1.bf16.msra.mxu0 %v2356
        %2427 = vmatprep.subr.bf16.mxu0 0
        %2428 = vmatpush1.bf16.msra.mxu0 %v2357
        %2429 = vmatprep.subr.bf16.mxu0 0
        %2430 = vmatpush1.bf16.msra.mxu0 %v2358
        %2431 = vmatprep.subr.bf16.mxu0 0
        %2432 = vmatpush1.bf16.msra.mxu0 %v2359
        %2433 = vmatprep.subr.bf16.mxu0 0
        %2434 = vmatpush1.bf16.msra.mxu0 %v2360
        %2435 = vmatprep.subr.bf16.mxu0 0
        %2436 = vmatpush1.bf16.msra.mxu0 %v2361
        %2437 = vmatprep.subr.bf16.mxu0 0
        %2438 = vmatpush1.bf16.msra.mxu0 %v2362
        %2439 = vmatprep.subr.bf16.mxu0 0
        %2440 = vmatpush1.bf16.msra.mxu0 %v2363
        %2441 = vmatprep.subr.bf16.mxu0 0
        %2442 = vmatpush1.bf16.msra.mxu0 %v2364
        %2443 = vmatprep.subr.bf16.mxu0 0
        %2444 = vmatpush1.bf16.msra.mxu0 %v2365
        %2445 = vmatprep.subr.bf16.mxu0 0
        %2446 = vmatpush1.bf16.msra.mxu0 %v2366
        %2447 = vmatprep.mubr.bf16.mxu0 %v2149
        %2448 = vmatmul.mubr.bf16.gmra.mrb[0].mxu0 %v2148
        %v2449 = vpop.f32.mrb[0].mxu0
        %v2450 = vadd.f32 %v2221, %v2449
        %v2451 = vpop.f32.mrb[0].mxu0
        %v2452 = vpop.f32.mrb[0].mxu0
        %v2453 = vpop.f32.mrb[0].mxu0
        %2454 = vdwg.mxu0
        %2455 = vmatprep.subr.bf16.mxu0 0
        %2456 = vmatpush1.bf16.msra.mxu0 %v2367
        %2457 = vmatprep.subr.bf16.mxu0 0
        %2458 = vmatpush1.bf16.msra.mxu0 %v2368
        %2459 = vmatprep.subr.bf16.mxu0 0
        %2460 = vmatpush1.bf16.msra.mxu0 %v2369
        %2461 = vmatprep.subr.bf16.mxu0 0
        %2462 = vmatpush1.bf16.msra.mxu0 %v2370
        %2463 = vmatprep.subr.bf16.mxu0 0
        %2464 = vmatpush1.bf16.msra.mxu0 %v2371
        %2465 = vmatprep.subr.bf16.mxu0 0
        %2466 = vmatpush1.bf16.msra.mxu0 %v2372
        %2467 = vmatprep.subr.bf16.mxu0 0
        %2468 = vmatpush1.bf16.msra.mxu0 %v2373
        %2469 = vmatprep.subr.bf16.mxu0 0
        %2470 = vmatpush1.bf16.msra.mxu0 %v2374
        %2471 = vmatprep.subr.bf16.mxu0 0
        %2472 = vmatpush1.bf16.msra.mxu0 %v2375
        %2473 = vmatprep.subr.bf16.mxu0 0
        %2474 = vmatpush1.bf16.msra.mxu0 %v2376
        %2475 = vmatprep.subr.bf16.mxu0 0
        %2476 = vmatpush1.bf16.msra.mxu0 %v2377
        %2477 = vmatprep.subr.bf16.mxu0 0
        %2478 = vmatpush1.bf16.msra.mxu0 %v2378
        %2479 = vmatprep.subr.bf16.mxu0 0
        %2480 = vmatpush1.bf16.msra.mxu0 %v2379
        %2481 = vmatprep.subr.bf16.mxu0 0
        %2482 = vmatpush1.bf16.msra.mxu0 %v2380
        %2483 = vmatprep.subr.bf16.mxu0 0
        %2484 = vmatpush1.bf16.msra.mxu0 %v2381
        %2485 = vmatprep.subr.bf16.mxu0 0
        %2486 = vmatpush1.bf16.msra.mxu0 %v2382
        %2487 = vmatprep.mubr.bf16.mxu0 %v2151
        %2488 = vmatmul.mubr.bf16.gmra.mrb[0].mxu0 %v2150
        %v2489 = vpop.f32.mrb[0].mxu0
        %v2490 = vadd.f32 %v2450, %v2489
        %v2491 = vpop.f32.mrb[0].mxu0
        %v2492 = vpop.f32.mrb[0].mxu0
        %v2493 = vpop.f32.mrb[0].mxu0
        %2494 = vdwg.mxu0
        %v2495 = vadd.f32 %v2490, %v1846
        %v2496 = vld [vmem:[%s756] sm:$0x1]
        %v2497 = vld [vmem:[%s759] sm:$0x1]
        %2498 = vadd.xlane.f32.xlu0 %v2495
        %v2499 = vpop.xlane.xlu0 %2498
        %v2500 = vmul.f32 %v2499, %v1823
        %v2501 = vsub.f32 %v2495, %v2500
        %v2502 = vmul.f32 %v2501, %v2501
        %2503 = vadd.xlane.f32.xlu0 %v2502
        %v2504 = vpop.xlane.xlu0 %2503
        %v2505 = vmul.f32 %v2504, %v1823
        %v2506 = vadd.f32 %v2505, 1e-05
        %v2507 = vrsqrt.pop %v2506
        %v2508 = vmul.f32 %v2501, %v2507
        %v2510 = vlaneseq
        %v2511 = vshrl.u32 %v2510, 7
        %v2512 = vsub.s32 0, %v2511
        %v2513 = vrot.slane %v2496, %v2512
        %v2515 = vmul.f32 %v2508, %v2513
        %v2517 = vlaneseq
        %v2518 = vshrl.u32 %v2517, 7
        %v2519 = vsub.s32 0, %v2518
        %v2520 = vrot.slane %v2497, %v2519
        %v2522 = vadd.f32 %v2515, %v2520
        %2523 = vst [vmem:[%s736] sm:$0xff] %v2522
        %s2524 = sand.u32 %s397, 1
        %s2525 = scalar_lea.sflag [#allocation4], %s2524
        %s2526 = sand.u32 %s397, 1
        %s2527 = smul.addr %s2526, 8
        %s2528 = scalar_lea.vmem [#allocation13], %s2527
        // Predicated region
        $region101: #{tpu_custom_call.1} parent=71 // pred_check
          %p2529 = pneg %p407
        $region102: #{tpu_custom_call.1} parent=71 // pred_check_branch
          %2531 = sbr.rel (%p2529) target = $region104
        $region103: #{tpu_custom_call.1} parent=71 // pred_region
          %s2533 = ssub.s32 128, 128
          %2534 = vsyncadd %s2525, %s2533
          %s2535 = smul.addr %s43, 128
          %s2536 = scalar_lea.hbm %s13, %s2535
          %s2538 = sshll.u32 %s2528, 4
          %s2539 = int_to_ptr.vmem [resolvable:$true] %s2538
          %2541 = dma.vmem_to_hbm [thread:$0]  %s2539, 128, %s2536, %s2525
        $region104: #{tpu_custom_call.1} parent=71 // pred_fallthru
          _
      $region72: #{tpu_custom_call.1} parent=5 // pred_fallthru
        _
      %p2542 = scmp.le.s32.totalorder 2, %s34
      // Predicated region
      $region105: #{tpu_custom_call.1} parent=5 // pred_check
        %p2543 = pneg %p2542
      $region106: #{tpu_custom_call.1} parent=5 // pred_check_branch
        %2545 = sbr.rel (%p2543) target = $region108
      $region107: #{tpu_custom_call.1} parent=5 // pred_region
        %s2546 = ssub.s32 %s34, 2
        // Predicated region
        $region109: #{tpu_custom_call.1} parent=107 // pred_check
          %p2547 = pneg %p413
        $region110: #{tpu_custom_call.1} parent=107 // pred_check_branch
          %2549 = sbr.rel (%p2547) target = $region112
        $region111: #{tpu_custom_call.1} parent=107 // pred_region
          %s2550 = sand.u32 %s398, 1
          %s2551 = scalar_lea.sflag [#allocation4], %s2550
          %s2552 = sand.u32 %s398, 1
          %s2553 = smul.addr %s2552, 8
          %s2554 = scalar_lea.vmem [#allocation13], %s2553
          %2555 = dma.done %s2551, 128
        $region112: #{tpu_custom_call.1} parent=107 // pred_fallthru
          _
      $region108: #{tpu_custom_call.1} parent=5 // pred_fallthru
        _
    $region6: #{tpu_custom_call.1} parent=1 // loop_footer
      %s38 = sadd.s32 1, %s34
    $region7: #{tpu_custom_call.1} parent=1 // loop_footer_branch
      %33 = sbr.rel target = $region3
    $region8: #{tpu_custom_call.1} parent=1 // loop_exit
      _
    %2556 = vsyncpa [#allocation3], 1
    %s2557 = scalar_lea.sflag [#allocation3], 1
    %2558 = vsyncpa %s2557, 1
    %2559 = vsyncpa [#allocation6], 1
    %s2560 = scalar_lea.sflag [#allocation6], 1
    %2561 = vsyncpa %s2560, 1
    %2562 = vsyncpa [#allocation9], 1
    %s2563 = scalar_lea.sflag [#allocation9], 1
    %2564 = vsyncpa %s2563, 1
    %2565 = vsyncpa [#allocation12], 1
    %s2566 = scalar_lea.sflag [#allocation12], 1
    %2567 = vsyncpa %s2566, 1
    %2568 = vsyncpa [#allocation4], 1
    %s2569 = scalar_lea.sflag [#allocation4], 1
    %2570 = vsyncpa %s2569, 1

</llo_original>
